<compile_context>
chip_gen: v7x
topology: tpu7x:2x2x1
jax: 0.10.0
libtpu: 0.0.40
codegen_flags: <defaults>
</compile_context>

<pallas_src>
import functools

import jax
import jax.numpy as jnp
from jax.experimental import pallas as pl
from jax.experimental.pallas import tpu as pltpu


def _round_up(x: int, m: int) -> int:
    return (x + m - 1) // m * m


# ----------------------------- fused decode-step kernel -----------------------------
def decoder_step_kernel(emb_ref, ctx_ref, h_ref,
                        w_ih_ref, b_ih_ref, w_hh_ref, b_hh_ref,
                        w_cls_ref, b_cls_ref,
                        logits_ref, h_out_ref,
                        xh_ref,
                        *, H, Hp):
    """Grid: (n_vocab_tiles,), "arbitrary" (sequential; xh scratch carries across tiles).

    emb_ref    (B, E)          f32   gathered embedding rows
    ctx_ref    (B, H)          f32   context  (squeezed from (B,1,H))
    h_ref      (B, H)          f32   previous hidden (squeezed from (1,B,H))
    w_ih_ref   (E+H, 3*Hp)     bf16  gate g occupies cols [g*Hp, g*Hp+H)
    b_ih_ref   (1, 3*Hp)       f32
    w_hh_ref   (H, 3*Hp)       f32   recurrent weights kept f32 (fidelity across steps)
    b_hh_ref   (1, 3*Hp)       f32
    w_cls_ref  (E+2H, TILE_V)  bf16  streamed classifier weight tile
    b_cls_ref  (1, TILE_V)     f32
    logits_ref (B, TILE_V)     f32   lane-dense output tile
    h_out_ref  (B, H)          f32   new hidden (squeezed from (1,B,H)); written at tile 0
    xh_ref     (B, E+2H)       bf16  VMEM scratch: [emb | ctx | h_new]
    """
    @pl.when(pl.program_id(0) == 0)
    def _gru_step():
        B = emb_ref.shape[0]
        emb = emb_ref[...]
        ctx = ctx_ref[...]
        h = h_ref[...]
        x = jnp.concatenate([emb, ctx], axis=-1)                       # (B, E+H) f32

        gi = jnp.dot(x.astype(jnp.bfloat16), w_ih_ref[...],
                     preferred_element_type=jnp.float32) + b_ih_ref[...]
        gh = jnp.dot(h, w_hh_ref[...],                                  # f32 recurrent path
                     preferred_element_type=jnp.float32) + b_hh_ref[...]

        # Gate blocks at 128-aligned offsets -> lane-aligned slices.
        r = jax.nn.sigmoid(gi[:, 0:Hp] + gh[:, 0:Hp])
        z = jax.nn.sigmoid(gi[:, Hp:2 * Hp] + gh[:, Hp:2 * Hp])
        n = jnp.tanh(gi[:, 2 * Hp:3 * Hp] + r * gh[:, 2 * Hp:3 * Hp])

        if Hp > H:
            h_wide = jnp.concatenate(
                [h, jnp.zeros((B, Hp - H), jnp.float32)], axis=-1)
        else:
            h_wide = h
        h_new = ((1.0 - z) * n + z * h_wide)[:, 0:H]                    # (B, H) f32

        h_out_ref[...] = h_new
        xh_ref[...] = jnp.concatenate([x, h_new], axis=-1).astype(jnp.bfloat16)

    # One fused MXU pass per streamed vocab tile (xh stays resident in the scratch).
    logits_ref[...] = (jnp.dot(xh_ref[...], w_cls_ref[...],
                               preferred_element_type=jnp.float32)
                       + b_cls_ref[...])


# ----------------------------- pallas_call wrapper -----------------------------
def _decoder_step_call(emb, context, h_n, params, dims):
    B, E = emb.shape
    H, Hp = dims["H"], dims["Hp"]
    Vp, TILE_V, K = dims["Vp"], dims["TILE_V"], dims["K"]
    n_tiles = Vp // TILE_V

    # VMEM budget: streamed classifier tiles (double-buffered) + resident GRU operands.
    vmem_need = (2 * K * TILE_V * 2            # classifier weight tiles (bf16)
                 + 2 * TILE_V * 4              # bias tiles
                 + 2 * B * TILE_V * 4          # logits tiles
                 + 2 * ((E + H) * 3 * Hp * 2 + H * 3 * Hp * 4 + 2 * 3 * Hp * 4)
                 + 2 * (B * E * 4 + 2 * B * H * 4)
                 + B * K * 2 + B * H * 4)      # xh scratch + h_out
    vmem_limit = int(min(48 * 2 ** 20, vmem_need + (4 << 20)))

    kernel = functools.partial(decoder_step_kernel, H=H, Hp=Hp)
    return pl.pallas_call(
        kernel,
        grid=(n_tiles,),
        in_specs=[
            pl.BlockSpec((B, E), lambda j: (0, 0)),               # emb
            pl.BlockSpec((B, None, H), lambda j: (0, 0, 0)),      # context (B,1,H) -> (B,H)
            pl.BlockSpec((None, B, H), lambda j: (0, 0, 0)),      # h_n (1,B,H) -> (B,H)
            pl.BlockSpec((E + H, 3 * Hp), lambda j: (0, 0)),      # w_ih_T (bf16)
            pl.BlockSpec((1, 3 * Hp), lambda j: (0, 0)),          # b_ih
            pl.BlockSpec((H, 3 * Hp), lambda j: (0, 0)),          # w_hh_T (f32)
            pl.BlockSpec((1, 3 * Hp), lambda j: (0, 0)),          # b_hh
            pl.BlockSpec((K, TILE_V), lambda j: (0, j)),          # w_cls_T tile (streamed)
            pl.BlockSpec((1, TILE_V), lambda j: (0, j)),          # b_cls tile
        ],
        out_specs=[
            pl.BlockSpec((B, TILE_V), lambda j: (0, j)),          # logits tile (lane-dense)
            pl.BlockSpec((None, B, H), lambda j: (0, 0, 0)),      # h_out (1,B,H)
        ],
        out_shape=[
            jax.ShapeDtypeStruct((B, Vp), jnp.float32),
            jax.ShapeDtypeStruct((1, B, H), jnp.float32),
        ],
        scratch_shapes=[pltpu.VMEM((B, K), jnp.bfloat16)],
        input_output_aliases={2: 1},   # reuse the h_n buffer for h_out (decode-loop friendly)
        compiler_params=pltpu.CompilerParams(
            dimension_semantics=("arbitrary",),
            vmem_limit_bytes=vmem_limit),
    )(emb, context, h_n,
      params["w_ih_T"], params["b_ih"], params["w_hh_T"], params["b_hh"],
      params["w_cls_T"], params["b_cls"])


def decoder_forward(trg_i, context, h_n, params, dims):
    """trg_i (B,) int32 ; context (B,1,H) f32 ; h_n (1,B,H) f32 -> (logits (B,V), h_n (1,B,H))."""
    # Embedding gather stays in XLA (the table can be HBM-sized); dropout is identity (eval).
    # TODO(synk): training-mode dropout (p=0.5) on the embedding is not implemented.
    emb = jnp.take(params["embedding"], trg_i, axis=0)                     # (B, E)
    logits_p, h_out = _decoder_step_call(emb, context, h_n, params, dims)
    return logits_p[:, :dims["V"]], h_out        # slice is the identity when Vp == V


# ----------------------------- parameter construction -----------------------------
def init_params(key, trg_vocab_size, embed_size, hidden_size, tile_v=1024):
    V, E, H = trg_vocab_size, embed_size, hidden_size
    Hp = _round_up(H, 128)
    Vp0 = _round_up(V, 128)
    TILE_V = min(_round_up(tile_v, 128), Vp0)
    Vp = _round_up(Vp0, TILE_V)
    K = E + 2 * H

    ks = jax.random.split(key, 7)
    scale = 0.1
    emb = scale * jax.random.normal(ks[0], (V, E), jnp.float32)
    emb = emb.at[2].set(0.0)                                               # padding_idx = 2
    w_ih = scale * jax.random.normal(ks[1], (3 * H, E + H), jnp.float32)   # PyTorch GRU layout
    w_hh = scale * jax.random.normal(ks[2], (3 * H, H), jnp.float32)
    b_ih = scale * jax.random.normal(ks[3], (3 * H,), jnp.float32)
    b_hh = scale * jax.random.normal(ks[4], (3 * H,), jnp.float32)
    w_cls = scale * jax.random.normal(ks[5], (V, E + 2 * H), jnp.float32)  # Linear(E+2H, V)
    b_cls = scale * jax.random.normal(ks[6], (V,), jnp.float32)

    # Transposed GRU weights; gate blocks (r, z, n) at 128-aligned column offsets 0, Hp, 2Hp.
    w_ih_T = jnp.zeros((E + H, 3 * Hp), jnp.float32)
    w_hh_T = jnp.zeros((H, 3 * Hp), jnp.float32)
    b_ih_p = jnp.zeros((1, 3 * Hp), jnp.float32)
    b_hh_p = jnp.zeros((1, 3 * Hp), jnp.float32)
    for g in range(3):
        w_ih_T = w_ih_T.at[:, g * Hp:g * Hp + H].set(w_ih[g * H:(g + 1) * H, :].T)
        w_hh_T = w_hh_T.at[:, g * Hp:g * Hp + H].set(w_hh[g * H:(g + 1) * H, :].T)
        b_ih_p = b_ih_p.at[0, g * Hp:g * Hp + H].set(b_ih[g * H:(g + 1) * H])
        b_hh_p = b_hh_p.at[0, g * Hp:g * Hp + H].set(b_hh[g * H:(g + 1) * H])

    # Classifier weight: rows are the exact [emb | ctx | h_new] layout (K = E+2H), vocab padded.
    w_cls_T = jnp.zeros((K, Vp), jnp.float32).at[:, :V].set(w_cls.T)
    b_cls_p = jnp.zeros((1, Vp), jnp.float32).at[0, :V].set(b_cls)

    params = {
        "embedding": emb,                               # (V, E)       f32
        "w_ih_T": w_ih_T.astype(jnp.bfloat16),          # (E+H, 3Hp)   bf16
        "b_ih": b_ih_p,                                 # (1, 3Hp)     f32
        "w_hh_T": w_hh_T,                               # (H, 3Hp)     f32 (recurrent path)
        "b_hh": b_hh_p,                                 # (1, 3Hp)     f32
        "w_cls_T": w_cls_T.astype(jnp.bfloat16),        # (K, Vp)      bf16 (streamed)
        "b_cls": b_cls_p,                               # (1, Vp)      f32
    }
    dims = {"V": V, "E": E, "H": H, "Hp": Hp, "Vp": Vp, "TILE_V": TILE_V, "K": K}
    ref = {"embedding": emb, "w_ih": w_ih, "w_hh": w_hh, "b_ih": b_ih,
           "b_hh": b_hh, "w_cls": w_cls, "b_cls": b_cls}
    return params, dims, ref


def reference_forward(trg_i, context, h_n, ref):
    """Pure-JAX f32 reference matching the PyTorch module (eval mode)."""
    emb = jnp.take(ref["embedding"], trg_i, axis=0)
    x = jnp.concatenate([emb, context[:, 0, :]], axis=-1)
    h = h_n[0]
    H = h.shape[-1]
    gi = x @ ref["w_ih"].T + ref["b_ih"]
    gh = h @ ref["w_hh"].T + ref["b_hh"]
    r = jax.nn.sigmoid(gi[:, :H] + gh[:, :H])
    z = jax.nn.sigmoid(gi[:, H:2 * H] + gh[:, H:2 * H])
    n = jnp.tanh(gi[:, 2 * H:] + r * gh[:, 2 * H:])
    h_new = (1.0 - z) * n + z * h
    logits = jnp.concatenate([x, h_new], axis=-1) @ ref["w_cls"].T + ref["b_cls"]
    return logits, h_new[None]


if __name__ == "__main__":
    trg_vocab_size = 2048    # -> 2 streamed vocab tiles of 1024 (exercises the grid path)
    embed_size = 32
    hidden_size = 32
    B = 8

    key = jax.random.PRNGKey(0)
    k_par, k_tok, k_ctx, k_hid = jax.random.split(key, 4)

    params, dims, ref = init_params(k_par, trg_vocab_size, embed_size, hidden_size)

    trg_i = jax.random.randint(k_tok, (B,), 0, trg_vocab_size, dtype=jnp.int32)
    context = jax.random.normal(k_ctx, (B, 1, hidden_size), jnp.float32)
    h_n = jax.random.normal(k_hid, (1, B, hidden_size), jnp.float32)

    fwd = jax.jit(lambda t, c, h: decoder_forward(t, c, h, params, dims))
    logits, h_new = fwd(trg_i, context, h_n)
    jax.block_until_ready((logits, h_new))

    ref_logits, ref_h = reference_forward(trg_i, context, h_n, ref)

    assert logits.shape == (B, trg_vocab_size)
    assert h_new.shape == (1, B, hidden_size)
    # bf16-streamed w_ih / w_cls vs f32 reference -> modest tolerances (w_hh kept f32).
    assert jnp.allclose(h_new, ref_h, atol=2e-2), float(jnp.max(jnp.abs(h_new - ref_h)))
    assert jnp.allclose(logits, ref_logits, atol=6e-2), float(jnp.max(jnp.abs(logits - ref_logits)))

    print("KERNEL_OK")
</pallas_src>

<mosaic_0001>
module attributes {stable_mosaic.version = 11 : i64} {
  func.func @decoder_step_kernel(%arg0: i32, %arg1: memref<8x32xf32, #tpu.memory_space<vmem>>, %arg2: memref<8x1x32xf32, #tpu.memory_space<vmem>>, %arg3: memref<1x8x32xf32, #tpu.memory_space<vmem>>, %arg4: memref<64x384xbf16, #tpu.memory_space<vmem>>, %arg5: memref<1x384xf32, #tpu.memory_space<vmem>>, %arg6: memref<32x384xf32, #tpu.memory_space<vmem>>, %arg7: memref<1x384xf32, #tpu.memory_space<vmem>>, %arg8: memref<96x1024xbf16, #tpu.memory_space<vmem>>, %arg9: memref<1x1024xf32, #tpu.memory_space<vmem>>, %arg10: memref<8x1024xf32, #tpu.memory_space<vmem>>, %arg11: memref<1x8x32xf32, #tpu.memory_space<vmem>>, %arg12: memref<8x96xbf16, #tpu.memory_space<vmem>>) attributes {dimension_semantics = [#tpu.dimension_semantics<arbitrary>], iteration_bounds = array<i64: 2>, scalar_prefetch = 0 : i64, scratch_operands = 1 : i64, tpu.core_type = #tpu.core_type<tc>, window_params = [{pipeline_mode = #tpu.pipeline_mode<synchronous>, transform_indices = @transform_0, window_bounds = array<i64: 8, 32>}, {pipeline_mode = #tpu.pipeline_mode<synchronous>, transform_indices = @transform_1, window_bounds = array<i64: 8, 1, 32>}, {pipeline_mode = #tpu.pipeline_mode<synchronous>, transform_indices = @transform_2, window_bounds = array<i64: 1, 8, 32>}, {pipeline_mode = #tpu.pipeline_mode<synchronous>, transform_indices = @transform_3, window_bounds = array<i64: 64, 384>}, {pipeline_mode = #tpu.pipeline_mode<synchronous>, transform_indices = @transform_4, window_bounds = array<i64: 1, 384>}, {pipeline_mode = #tpu.pipeline_mode<synchronous>, transform_indices = @transform_5, window_bounds = array<i64: 32, 384>}, {pipeline_mode = #tpu.pipeline_mode<synchronous>, transform_indices = @transform_6, window_bounds = array<i64: 1, 384>}, {transform_indices = @transform_7, window_bounds = array<i64: 96, 1024>}, {transform_indices = @transform_8, window_bounds = array<i64: 1, 1024>}, {transform_indices = @transform_9, window_bounds = array<i64: 8, 1024>}, {pipeline_mode = #tpu.pipeline_mode<synchronous>, transform_indices = @transform_10, window_bounds = array<i64: 1, 8, 32>}]} {
    %c0_i32 = arith.constant 0 : i32
    %0 = arith.cmpi eq, %arg0, %c0_i32 : i32
    %1 = arith.extui %0 : i1 to i32
    %c0_i32_0 = arith.constant 0 : i32
    %2 = arith.cmpi ne, %1, %c0_i32_0 : i32
    scf.if %2 {
      %c0_8 = arith.constant 0 : index
      %c0_9 = arith.constant 0 : index
      %10 = vector.load %arg1[%c0_8, %c0_9] : memref<8x32xf32, #tpu.memory_space<vmem>>, vector<8x32xf32>
      %c0_10 = arith.constant 0 : index
      %c0_11 = arith.constant 0 : index
      %c0_12 = arith.constant 0 : index
      %11 = vector.load %arg2[%c0_10, %c0_11, %c0_12] : memref<8x1x32xf32, #tpu.memory_space<vmem>>, vector<8x1x32xf32>
      %12 = vector.shape_cast %11 : vector<8x1x32xf32> to vector<8x32xf32>
      %c0_13 = arith.constant 0 : index
      %c0_14 = arith.constant 0 : index
      %c0_15 = arith.constant 0 : index
      %13 = vector.load %arg3[%c0_13, %c0_14, %c0_15] : memref<1x8x32xf32, #tpu.memory_space<vmem>>, vector<1x8x32xf32>
      %14 = vector.shape_cast %13 : vector<1x8x32xf32> to vector<8x32xf32>
      %15 = tpu.concatenate %10, %12 in 1 : vector<8x32xf32>, vector<8x32xf32> -> vector<8x64xf32>
      %16 = arith.truncf %15 : vector<8x64xf32> to vector<8x64xbf16>
      %c0_16 = arith.constant 0 : index
      %c0_17 = arith.constant 0 : index
      %17 = vector.load %arg4[%c0_16, %c0_17] : memref<64x384xbf16, #tpu.memory_space<vmem>>, vector<64x384xbf16>
      %cst_18 = arith.constant dense<0.000000e+00> : vector<8x384xf32>
      %18 = tpu.matmul %16, %17, %cst_18 {dimension_numbers = #tpu.dot_dimension_numbers<[1], [0], [0], [1], [0, 0, 1, 1], [], []>} : vector<8x64xbf16>, vector<64x384xbf16>, vector<8x384xf32> -> vector<8x384xf32>
      %c0_19 = arith.constant 0 : index
      %c0_20 = arith.constant 0 : index
      %19 = vector.load %arg5[%c0_19, %c0_20] : memref<1x384xf32, #tpu.memory_space<vmem>>, vector<1x384xf32>
      %20 = vector.broadcast %19 : vector<1x384xf32> to vector<8x384xf32>
      %21 = arith.addf %18, %20 : vector<8x384xf32>
      %c0_21 = arith.constant 0 : index
      %c0_22 = arith.constant 0 : index
      %22 = vector.load %arg6[%c0_21, %c0_22] : memref<32x384xf32, #tpu.memory_space<vmem>>, vector<32x384xf32>
      %cst_23 = arith.constant dense<0.000000e+00> : vector<8x384xf32>
      %23 = tpu.matmul %14, %22, %cst_23 {dimension_numbers = #tpu.dot_dimension_numbers<[1], [0], [0], [1], [0, 0, 1, 1], [], []>} : vector<8x32xf32>, vector<32x384xf32>, vector<8x384xf32> -> vector<8x384xf32>
      %c0_24 = arith.constant 0 : index
      %c0_25 = arith.constant 0 : index
      %24 = vector.load %arg7[%c0_24, %c0_25] : memref<1x384xf32, #tpu.memory_space<vmem>>, vector<1x384xf32>
      %25 = vector.broadcast %24 : vector<1x384xf32> to vector<8x384xf32>
      %26 = arith.addf %23, %25 : vector<8x384xf32>
      %27 = vector.extract_strided_slice %21 {offsets = [0, 0], sizes = [8, 128], strides = [1, 1]} : vector<8x384xf32> to vector<8x128xf32>
      %28 = vector.extract_strided_slice %26 {offsets = [0, 0], sizes = [8, 128], strides = [1, 1]} : vector<8x384xf32> to vector<8x128xf32>
      %29 = arith.addf %27, %28 : vector<8x128xf32>
      %30 = arith.negf %29 : vector<8x128xf32>
      %31 = math.exp %30 : vector<8x128xf32>
      %cst_26 = arith.constant 1.000000e+00 : f32
      %32 = vector.broadcast %cst_26 : f32 to vector<8x128xf32>
      %33 = arith.addf %32, %31 : vector<8x128xf32>
      %34 = arith.divf %32, %33 : vector<8x128xf32>
      %35 = vector.extract_strided_slice %21 {offsets = [0, 128], sizes = [8, 128], strides = [1, 1]} : vector<8x384xf32> to vector<8x128xf32>
      %36 = vector.extract_strided_slice %26 {offsets = [0, 128], sizes = [8, 128], strides = [1, 1]} : vector<8x384xf32> to vector<8x128xf32>
      %37 = arith.addf %35, %36 : vector<8x128xf32>
      %38 = arith.negf %37 : vector<8x128xf32>
      %39 = math.exp %38 : vector<8x128xf32>
      %cst_27 = arith.constant 1.000000e+00 : f32
      %40 = vector.broadcast %cst_27 : f32 to vector<8x128xf32>
      %41 = arith.addf %40, %39 : vector<8x128xf32>
      %42 = arith.divf %40, %41 : vector<8x128xf32>
      %43 = vector.extract_strided_slice %21 {offsets = [0, 256], sizes = [8, 128], strides = [1, 1]} : vector<8x384xf32> to vector<8x128xf32>
      %44 = vector.extract_strided_slice %26 {offsets = [0, 256], sizes = [8, 128], strides = [1, 1]} : vector<8x384xf32> to vector<8x128xf32>
      %45 = arith.mulf %34, %44 : vector<8x128xf32>
      %46 = arith.addf %43, %45 : vector<8x128xf32>
      %47 = math.tanh %46 : vector<8x128xf32>
      %cst_28 = arith.constant 0.000000e+00 : f32
      %48 = vector.broadcast %cst_28 : f32 to vector<8x96xf32>
      %49 = tpu.concatenate %14, %48 in 1 : vector<8x32xf32>, vector<8x96xf32> -> vector<8x128xf32>
      %cst_29 = arith.constant 1.000000e+00 : f32
      %50 = vector.broadcast %cst_29 : f32 to vector<8x128xf32>
      %51 = arith.subf %50, %42 : vector<8x128xf32>
      %52 = arith.mulf %51, %47 : vector<8x128xf32>
      %53 = arith.mulf %42, %49 : vector<8x128xf32>
      %54 = arith.addf %52, %53 : vector<8x128xf32>
      %55 = vector.extract_strided_slice %54 {offsets = [0, 0], sizes = [8, 32], strides = [1, 1]} : vector<8x128xf32> to vector<8x32xf32>
      %c0_30 = arith.constant 0 : index
      %c0_31 = arith.constant 0 : index
      %c0_32 = arith.constant 0 : index
      %56 = vector.load %arg11[%c0_30, %c0_31, %c0_32] : memref<1x8x32xf32, #tpu.memory_space<vmem>>, vector<1x8x32xf32>
      %57 = vector.shape_cast %56 : vector<1x8x32xf32> to vector<8x32xf32>
      %58 = vector.shape_cast %55 : vector<8x32xf32> to vector<1x8x32xf32>
      tpu.vector_store %arg11[%c0_30, %c0_31, %c0_32], %58 {strides = array<i32>} : memref<1x8x32xf32, #tpu.memory_space<vmem>>, vector<1x8x32xf32>,
      %59 = tpu.concatenate %15, %55 in 1 : vector<8x64xf32>, vector<8x32xf32> -> vector<8x96xf32>
      %60 = arith.truncf %59 : vector<8x96xf32> to vector<8x96xbf16>
      %c0_33 = arith.constant 0 : index
      %c0_34 = arith.constant 0 : index
      %61 = vector.load %arg12[%c0_33, %c0_34] : memref<8x96xbf16, #tpu.memory_space<vmem>>, vector<8x96xbf16>
      tpu.vector_store %arg12[%c0_33, %c0_34], %60 {strides = array<i32>} : memref<8x96xbf16, #tpu.memory_space<vmem>>, vector<8x96xbf16>,
    } else {
    }
    %c0 = arith.constant 0 : index
    %c0_1 = arith.constant 0 : index
    %3 = vector.load %arg12[%c0, %c0_1] : memref<8x96xbf16, #tpu.memory_space<vmem>>, vector<8x96xbf16>
    %c0_2 = arith.constant 0 : index
    %c0_3 = arith.constant 0 : index
    %4 = vector.load %arg8[%c0_2, %c0_3] : memref<96x1024xbf16, #tpu.memory_space<vmem>>, vector<96x1024xbf16>
    %cst = arith.constant dense<0.000000e+00> : vector<8x1024xf32>
    %5 = tpu.matmul %3, %4, %cst {dimension_numbers = #tpu.dot_dimension_numbers<[1], [0], [0], [1], [0, 0, 1, 1], [], []>} : vector<8x96xbf16>, vector<96x1024xbf16>, vector<8x1024xf32> -> vector<8x1024xf32>
    %c0_4 = arith.constant 0 : index
    %c0_5 = arith.constant 0 : index
    %6 = vector.load %arg9[%c0_4, %c0_5] : memref<1x1024xf32, #tpu.memory_space<vmem>>, vector<1x1024xf32>
    %7 = vector.broadcast %6 : vector<1x1024xf32> to vector<8x1024xf32>
    %8 = arith.addf %5, %7 : vector<8x1024xf32>
    %c0_6 = arith.constant 0 : index
    %c0_7 = arith.constant 0 : index
    %9 = vector.load %arg10[%c0_6, %c0_7] : memref<8x1024xf32, #tpu.memory_space<vmem>>, vector<8x1024xf32>
    tpu.vector_store %arg10[%c0_6, %c0_7], %8 {strides = array<i32>} : memref<8x1024xf32, #tpu.memory_space<vmem>>, vector<8x1024xf32>,
    return
  }
  func.func @transform_0(%arg0: i32) -> (i32, i32) {
    %c0_i32 = arith.constant 0 : i32
    %c0_i32_0 = arith.constant 0 : i32
    %c0_i32_1 = arith.constant 0 : i32
    return %c0_i32, %c0_i32_0 : i32, i32
  }
  func.func @transform_1(%arg0: i32) -> (i32, i32, i32) {
    %c0_i32 = arith.constant 0 : i32
    %c0_i32_0 = arith.constant 0 : i32
    %c0_i32_1 = arith.constant 0 : i32
    %c0_i32_2 = arith.constant 0 : i32
    return %c0_i32, %c0_i32_0, %c0_i32_1 : i32, i32, i32
  }
  func.func @transform_2(%arg0: i32) -> (i32, i32, i32) {
    %c0_i32 = arith.constant 0 : i32
    %c0_i32_0 = arith.constant 0 : i32
    %c0_i32_1 = arith.constant 0 : i32
    %c0_i32_2 = arith.constant 0 : i32
    return %c0_i32, %c0_i32_0, %c0_i32_1 : i32, i32, i32
  }
  func.func @transform_3(%arg0: i32) -> (i32, i32) {
    %c0_i32 = arith.constant 0 : i32
    %c0_i32_0 = arith.constant 0 : i32
    %c0_i32_1 = arith.constant 0 : i32
    return %c0_i32, %c0_i32_0 : i32, i32
  }
  func.func @transform_4(%arg0: i32) -> (i32, i32) {
    %c0_i32 = arith.constant 0 : i32
    %c0_i32_0 = arith.constant 0 : i32
    %c0_i32_1 = arith.constant 0 : i32
    return %c0_i32, %c0_i32_0 : i32, i32
  }
  func.func @transform_5(%arg0: i32) -> (i32, i32) {
    %c0_i32 = arith.constant 0 : i32
    %c0_i32_0 = arith.constant 0 : i32
    %c0_i32_1 = arith.constant 0 : i32
    return %c0_i32, %c0_i32_0 : i32, i32
  }
  func.func @transform_6(%arg0: i32) -> (i32, i32) {
    %c0_i32 = arith.constant 0 : i32
    %c0_i32_0 = arith.constant 0 : i32
    %c0_i32_1 = arith.constant 0 : i32
    return %c0_i32, %c0_i32_0 : i32, i32
  }
  func.func @transform_7(%arg0: i32) -> (i32, i32) {
    %c0_i32 = arith.constant 0 : i32
    %c0_i32_0 = arith.constant 0 : i32
    return %c0_i32, %arg0 : i32, i32
  }
  func.func @transform_8(%arg0: i32) -> (i32, i32) {
    %c0_i32 = arith.constant 0 : i32
    %c0_i32_0 = arith.constant 0 : i32
    return %c0_i32, %arg0 : i32, i32
  }
  func.func @transform_9(%arg0: i32) -> (i32, i32) {
    %c0_i32 = arith.constant 0 : i32
    %c0_i32_0 = arith.constant 0 : i32
    return %c0_i32, %arg0 : i32, i32
  }
  func.func @transform_10(%arg0: i32) -> (i32, i32, i32) {
    %c0_i32 = arith.constant 0 : i32
    %c0_i32_0 = arith.constant 0 : i32
    %c0_i32_1 = arith.constant 0 : i32
    %c0_i32_2 = arith.constant 0 : i32
    return %c0_i32, %c0_i32_0, %c0_i32_1 : i32, i32, i32
  }
}

</mosaic_0001>

<llo_original>
// kernel: _lambda_.1
$region0: #{_lambda_.1}
  #allocation0 [shape = 'u32[]', space=smem, size = 0x4, offset = 0x4, fixed_abs, tag = 'smem constant byte address 0x4 - core index']
  #allocation1 [shape = 'u32[144,128]{1,0:T(1,128)}', space=vmem, size = 0x12000, scoped, tag = 'internal scratch']
  #allocation2 [shape = 'bf16[8,96]{1,0:T(8,128)(2,1)}', space=vmem, size = 0x800, scoped, tag = 'scratch operand']
  %s0 = inlined_call_operand.vmem [shape: f32[8,32], index: 0, kind: input, shape index: {}]
  %s1 = inlined_call_operand.vmem [shape: f32[8,1,32], index: 1, kind: input, shape index: {}]
  %s2 = inlined_call_operand.hbm [shape: f32[1,8,32], index: 2, kind: input, shape index: {}, may-alias: {2,10}]
  %s3 = inlined_call_operand.vmem [shape: bf16[64,384], index: 3, kind: input, shape index: {}]
  %s4 = inlined_call_operand.vmem [shape: f32[1,384], index: 4, kind: input, shape index: {}]
  %s5 = inlined_call_operand.vmem [shape: f32[32,384], index: 5, kind: input, shape index: {}]
  %s6 = inlined_call_operand.vmem [shape: f32[1,384], index: 6, kind: input, shape index: {}]
  %s7 = inlined_call_operand.vmem [shape: bf16[96,2048], index: 7, kind: input, shape index: {}]
  %s8 = inlined_call_operand.vmem [shape: f32[1,2048], index: 8, kind: input, shape index: {}]
  %s9 = inlined_call_operand.hbm [shape: f32[8,2048], index: 9, kind: output, shape index: {0}]
  %s10 = inlined_call_operand.hbm [shape: f32[1,8,32], index: 10, kind: output, shape index: {1}, may-alias: {2,10}]
  %11 = xla_tuple %s9, %s10
  %s12 = sld [smem:[#allocation0]]
  $region108: #{_lambda_.1} parent=0
    _
  %s14 = ssub.s32 1, %s12
  %s15 = scalar_select 0, %s14, %s12
  $region1: #{_lambda_.1} parent=0
    #allocation3 [shape = 'u8[4096]{0}', space=vmem, size = 0x1000, scoped, tag = 'input window, operand 2, single buffered']
    #allocation4 [shape = 's32[2]{0}', space=sflag, size = 0x8, scoped, tag = 'scoped memory for _lambda_.1']
    #allocation5 [shape = 's32[2]{0}', space=sflag, size = 0x8, scoped, tag = 'scoped memory for _lambda_.1']
    #allocation6 [shape = 'u8[393216]{0}', space=vmem, size = 0x60000, scoped, tag = 'input window, operand 7']
    #allocation7 [shape = 'u8[65536]{0}', space=vmem, size = 0x10000, scoped, tag = 'output window, operand 0']
    #allocation8 [shape = 'u8[4096]{0}', space=vmem, size = 0x1000, scoped, tag = 'output window, operand 1, single buffered']
    #allocation9 [shape = 's32[1]{0}', space=sflag, size = 0x4, scoped, tag = 'scoped memory for _lambda_.1']
    %16 = vsyncpa [#allocation4], 0
    %17 = vsyncpa [#allocation5], 0
    %s18 = scalar_lea.sflag [#allocation5], 1
    %19 = vsyncpa %s18, 0
    %20 = vsyncpa [#allocation9], 0
    loop: start=0, step=1, limit=4
    $region2: #{_lambda_.1} parent=1 // loop_pre_header
      _
    $region3: #{_lambda_.1} parent=1 // loop_header
      %s22 = sphi 0, %s26
      %p23 = scmp.ge.s32.totalorder %s22, 4
      %s30 = sphi 0, %s30
      %s32 = sphi 0, %s30
      %s33 = sphi 0, %s32
      %s47 = sphi 0, %s33
      %s51 = sphi 0, %s51
      %s53 = sphi 0, %s51
      %s54 = sphi 0, %s53
      %s68 = sphi 0, %s54
      %s72 = sphi 0, %s72
      %s74 = sphi 0, %s72
      %s75 = sphi 0, %s74
      %s89 = sphi 0, %s75
      %s93 = sphi 0, %s93
      %s95 = sphi 0, %s93
      %s96 = sphi 0, %s95
      %s110 = sphi 0, %s96
      %s114 = sphi 0, %s114
      %s116 = sphi 0, %s114
      %s117 = sphi 0, %s116
      %s131 = sphi 0, %s117
      %s135 = sphi 0, %s135
      %s137 = sphi 0, %s135
      %s138 = sphi 0, %s137
      %s152 = sphi 0, %s138
      %s156 = sphi 0, %s156
      %s158 = sphi 0, %s156
      %s159 = sphi 0, %s158
      %s173 = sphi 0, %s159
      %s179 = sphi 0, %s181
      %s182 = sphi 0, %s179
      %s183 = sphi 0, %s182
      %s199 = sphi 0, %s183
      %s205 = sphi 0, %s207
      %s208 = sphi 0, %s205
      %s209 = sphi 0, %s208
      %s225 = sphi 0, %s209
      %s231 = sphi 0, %s233
      %s234 = sphi 0, %s231
      %s235 = sphi 0, %s234
      %s251 = sphi 0, %s235
      %s255 = sphi 0, %s255
      %s257 = sphi 0, %s255
      %s258 = sphi 0, %s257
      %s272 = sphi 0, %s258
    $region4: #{_lambda_.1} parent=1 // loop_header_branch
      %25 = sbr.rel (%p23) target = $region8
    $region5: #{_lambda_.1} parent=1 // loop_body
      %s27 = ssub.s32 %s22, 1
      %s28 = ssub.s32 %s22, 2
      %s29 = sadd.s32 %s22, 1
      %s31 = sadd.s32 %s30, 1
      %p34 = scmp.eq.s32.totalorder %s22, 1
      %p35 = scmp.ne.s32.totalorder %s30, %s32
      %p36 = scmp.eq.s32.totalorder %s22, 0
      %p37 = por %p35, %p36
      %p38 = scmp.ne.s32.totalorder %s30, %s32
      %p39 = scmp.eq.s32.totalorder %s27, 1
      %p40 = por %p38, %p39
      %p41 = scmp.ne.s32.totalorder %s32, %s33
      %p42 = scmp.eq.s32.totalorder %s27, 0
      %p43 = por %p41, %p42
      %p44 = scmp.ne.s32.totalorder %s32, %s33
      %p45 = scmp.eq.s32.totalorder %s28, 1
      %p46 = por %p44, %p45
      %p48 = scmp.ne.s32.totalorder %s33, %s47
      %p49 = scmp.eq.s32.totalorder %s28, 0
      %p50 = por %p48, %p49
      %s52 = sadd.s32 %s51, 1
      %p55 = scmp.eq.s32.totalorder %s22, 1
      %p56 = scmp.ne.s32.totalorder %s51, %s53
      %p57 = scmp.eq.s32.totalorder %s22, 0
      %p58 = por %p56, %p57
      %p59 = scmp.ne.s32.totalorder %s51, %s53
      %p60 = scmp.eq.s32.totalorder %s27, 1
      %p61 = por %p59, %p60
      %p62 = scmp.ne.s32.totalorder %s53, %s54
      %p63 = scmp.eq.s32.totalorder %s27, 0
      %p64 = por %p62, %p63
      %p65 = scmp.ne.s32.totalorder %s53, %s54
      %p66 = scmp.eq.s32.totalorder %s28, 1
      %p67 = por %p65, %p66
      %p69 = scmp.ne.s32.totalorder %s54, %s68
      %p70 = scmp.eq.s32.totalorder %s28, 0
      %p71 = por %p69, %p70
      %s73 = sadd.s32 %s72, 1
      %p76 = scmp.eq.s32.totalorder %s22, 1
      %p77 = scmp.ne.s32.totalorder %s72, %s74
      %p78 = scmp.eq.s32.totalorder %s22, 0
      %p79 = por %p77, %p78
      %p80 = scmp.ne.s32.totalorder %s72, %s74
      %p81 = scmp.eq.s32.totalorder %s27, 1
      %p82 = por %p80, %p81
      %p83 = scmp.ne.s32.totalorder %s74, %s75
      %p84 = scmp.eq.s32.totalorder %s27, 0
      %p85 = por %p83, %p84
      %p86 = scmp.ne.s32.totalorder %s74, %s75
      %p87 = scmp.eq.s32.totalorder %s28, 1
      %p88 = por %p86, %p87
      %p90 = scmp.ne.s32.totalorder %s75, %s89
      %p91 = scmp.eq.s32.totalorder %s28, 0
      %p92 = por %p90, %p91
      %s94 = sadd.s32 %s93, 1
      %p97 = scmp.eq.s32.totalorder %s22, 1
      %p98 = scmp.ne.s32.totalorder %s93, %s95
      %p99 = scmp.eq.s32.totalorder %s22, 0
      %p100 = por %p98, %p99
      %p101 = scmp.ne.s32.totalorder %s93, %s95
      %p102 = scmp.eq.s32.totalorder %s27, 1
      %p103 = por %p101, %p102
      %p104 = scmp.ne.s32.totalorder %s95, %s96
      %p105 = scmp.eq.s32.totalorder %s27, 0
      %p106 = por %p104, %p105
      %p107 = scmp.ne.s32.totalorder %s95, %s96
      %p108 = scmp.eq.s32.totalorder %s28, 1
      %p109 = por %p107, %p108
      %p111 = scmp.ne.s32.totalorder %s96, %s110
      %p112 = scmp.eq.s32.totalorder %s28, 0
      %p113 = por %p111, %p112
      %s115 = sadd.s32 %s114, 1
      %p118 = scmp.eq.s32.totalorder %s22, 1
      %p119 = scmp.ne.s32.totalorder %s114, %s116
      %p120 = scmp.eq.s32.totalorder %s22, 0
      %p121 = por %p119, %p120
      %p122 = scmp.ne.s32.totalorder %s114, %s116
      %p123 = scmp.eq.s32.totalorder %s27, 1
      %p124 = por %p122, %p123
      %p125 = scmp.ne.s32.totalorder %s116, %s117
      %p126 = scmp.eq.s32.totalorder %s27, 0
      %p127 = por %p125, %p126
      %p128 = scmp.ne.s32.totalorder %s116, %s117
      %p129 = scmp.eq.s32.totalorder %s28, 1
      %p130 = por %p128, %p129
      %p132 = scmp.ne.s32.totalorder %s117, %s131
      %p133 = scmp.eq.s32.totalorder %s28, 0
      %p134 = por %p132, %p133
      %s136 = sadd.s32 %s135, 1
      %p139 = scmp.eq.s32.totalorder %s22, 1
      %p140 = scmp.ne.s32.totalorder %s135, %s137
      %p141 = scmp.eq.s32.totalorder %s22, 0
      %p142 = por %p140, %p141
      %p143 = scmp.ne.s32.totalorder %s135, %s137
      %p144 = scmp.eq.s32.totalorder %s27, 1
      %p145 = por %p143, %p144
      %p146 = scmp.ne.s32.totalorder %s137, %s138
      %p147 = scmp.eq.s32.totalorder %s27, 0
      %p148 = por %p146, %p147
      %p149 = scmp.ne.s32.totalorder %s137, %s138
      %p150 = scmp.eq.s32.totalorder %s28, 1
      %p151 = por %p149, %p150
      %p153 = scmp.ne.s32.totalorder %s138, %s152
      %p154 = scmp.eq.s32.totalorder %s28, 0
      %p155 = por %p153, %p154
      %s157 = sadd.s32 %s156, 1
      %p160 = scmp.eq.s32.totalorder %s22, 1
      %p161 = scmp.ne.s32.totalorder %s156, %s158
      %p162 = scmp.eq.s32.totalorder %s22, 0
      %p163 = por %p161, %p162
      %p164 = scmp.ne.s32.totalorder %s156, %s158
      %p165 = scmp.eq.s32.totalorder %s27, 1
      %p166 = por %p164, %p165
      %p167 = scmp.ne.s32.totalorder %s158, %s159
      %p168 = scmp.eq.s32.totalorder %s27, 0
      %p169 = por %p167, %p168
      %p170 = scmp.ne.s32.totalorder %s158, %s159
      %p171 = scmp.eq.s32.totalorder %s28, 1
      %p172 = por %p170, %p171
      %p174 = scmp.ne.s32.totalorder %s159, %s173
      %p175 = scmp.eq.s32.totalorder %s28, 0
      %p176 = por %p174, %p175
      %s177 = ssub.s32 %s22, %s29
      %p178 = scmp.eq.s32.totalorder %s177, 0
      %s180 = sadd.s32 %s179, 1
      %s181 = scalar_select %p178, %s179, %s180
      %p184 = pneg %p178
      %p185 = scmp.eq.s32.totalorder %s22, 1
      %p186 = por %p184, %p185
      %p187 = scmp.ne.s32.totalorder %s179, %s182
      %p188 = scmp.eq.s32.totalorder %s22, 0
      %p189 = por %p187, %p188
      %p190 = scmp.ne.s32.totalorder %s179, %s182
      %p191 = scmp.eq.s32.totalorder %s27, 1
      %p192 = por %p190, %p191
      %p193 = scmp.ne.s32.totalorder %s182, %s183
      %p194 = scmp.eq.s32.totalorder %s27, 0
      %p195 = por %p193, %p194
      %p196 = scmp.ne.s32.totalorder %s182, %s183
      %p197 = scmp.eq.s32.totalorder %s28, 1
      %p198 = por %p196, %p197
      %p200 = scmp.ne.s32.totalorder %s183, %s199
      %p201 = scmp.eq.s32.totalorder %s28, 0
      %p202 = por %p200, %p201
      %s203 = ssub.s32 %s22, %s29
      %p204 = scmp.eq.s32.totalorder %s203, 0
      %s206 = sadd.s32 %s205, 1
      %s207 = scalar_select %p204, %s205, %s206
      %p210 = pneg %p204
      %p211 = scmp.eq.s32.totalorder %s22, 1
      %p212 = por %p210, %p211
      %p213 = scmp.ne.s32.totalorder %s205, %s208
      %p214 = scmp.eq.s32.totalorder %s22, 0
      %p215 = por %p213, %p214
      %p216 = scmp.ne.s32.totalorder %s205, %s208
      %p217 = scmp.eq.s32.totalorder %s27, 1
      %p218 = por %p216, %p217
      %p219 = scmp.ne.s32.totalorder %s208, %s209
      %p220 = scmp.eq.s32.totalorder %s27, 0
      %p221 = por %p219, %p220
      %p222 = scmp.ne.s32.totalorder %s208, %s209
      %p223 = scmp.eq.s32.totalorder %s28, 1
      %p224 = por %p222, %p223
      %p226 = scmp.ne.s32.totalorder %s209, %s225
      %p227 = scmp.eq.s32.totalorder %s28, 0
      %p228 = por %p226, %p227
      %s229 = ssub.s32 %s22, %s29
      %p230 = scmp.eq.s32.totalorder %s229, 0
      %s232 = sadd.s32 %s231, 1
      %s233 = scalar_select %p230, %s231, %s232
      %p236 = pneg %p230
      %p237 = scmp.eq.s32.totalorder %s22, 1
      %p238 = por %p236, %p237
      %p239 = scmp.ne.s32.totalorder %s231, %s234
      %p240 = scmp.eq.s32.totalorder %s22, 0
      %p241 = por %p239, %p240
      %p242 = scmp.ne.s32.totalorder %s231, %s234
      %p243 = scmp.eq.s32.totalorder %s27, 1
      %p244 = por %p242, %p243
      %p245 = scmp.ne.s32.totalorder %s234, %s235
      %p246 = scmp.eq.s32.totalorder %s27, 0
      %p247 = por %p245, %p246
      %p248 = scmp.ne.s32.totalorder %s234, %s235
      %p249 = scmp.eq.s32.totalorder %s28, 1
      %p250 = por %p248, %p249
      %p252 = scmp.ne.s32.totalorder %s235, %s251
      %p253 = scmp.eq.s32.totalorder %s28, 0
      %p254 = por %p252, %p253
      %s256 = sadd.s32 %s255, 1
      %p259 = scmp.eq.s32.totalorder %s22, 1
      %p260 = scmp.ne.s32.totalorder %s255, %s257
      %p261 = scmp.eq.s32.totalorder %s22, 0
      %p262 = por %p260, %p261
      %p263 = scmp.ne.s32.totalorder %s255, %s257
      %p264 = scmp.eq.s32.totalorder %s27, 1
      %p265 = por %p263, %p264
      %p266 = scmp.ne.s32.totalorder %s257, %s258
      %p267 = scmp.eq.s32.totalorder %s27, 0
      %p268 = por %p266, %p267
      %p269 = scmp.ne.s32.totalorder %s257, %s258
      %p270 = scmp.eq.s32.totalorder %s28, 1
      %p271 = por %p269, %p270
      %p273 = scmp.ne.s32.totalorder %s258, %s272
      %p274 = scmp.eq.s32.totalorder %s28, 0
      %p275 = por %p273, %p274
      %p276 = scmp.le.s32.totalorder 1, %s22
      %p277 = scmp.lt.s32.totalorder %s22, 3
      %p278 = pnand %p276, %p277
      %p279 = pneg %p278
      // Predicated region
      $region9: #{_lambda_.1} parent=5 // pred_check
        _
      $region10: #{_lambda_.1} parent=5 // pred_check_branch
        %281 = sbr.rel (%p278) target = $region12
      $region11: #{_lambda_.1} parent=5 // pred_region
        %s282 = ssub.s32 %s22, 1
        // Predicated region
        $region13: #{_lambda_.1} parent=11 // pred_check
          %p283 = pneg %p43
        $region14: #{_lambda_.1} parent=11 // pred_check_branch
          %285 = sbr.rel (%p283) target = $region16
        $region15: #{_lambda_.1} parent=11 // pred_region
          _
        $region16: #{_lambda_.1} parent=11 // pred_fallthru
          _
        // Predicated region
        $region17: #{_lambda_.1} parent=11 // pred_check
          %p286 = pneg %p64
        $region18: #{_lambda_.1} parent=11 // pred_check_branch
          %288 = sbr.rel (%p286) target = $region20
        $region19: #{_lambda_.1} parent=11 // pred_region
          _
        $region20: #{_lambda_.1} parent=11 // pred_fallthru
          _
        // Predicated region
        $region21: #{_lambda_.1} parent=11 // pred_check
          %p289 = pneg %p85
        $region22: #{_lambda_.1} parent=11 // pred_check_branch
          %291 = sbr.rel (%p289) target = $region24
        $region23: #{_lambda_.1} parent=11 // pred_region
          %s293 = ssub.s32 128, 128
          %294 = vsyncadd [#allocation4], %s293
          %s296 = sshll.u32 [#allocation3], 4
          %s297 = int_to_ptr.vmem [resolvable:$true] %s296
          %299 = dma.hbm_to_vmem [thread:$0]  %s2, 128, %s297, [#allocation4]
        $region24: #{_lambda_.1} parent=11 // pred_fallthru
          _
        // Predicated region
        $region25: #{_lambda_.1} parent=11 // pred_check
          %p300 = pneg %p106
        $region26: #{_lambda_.1} parent=11 // pred_check_branch
          %302 = sbr.rel (%p300) target = $region28
        $region27: #{_lambda_.1} parent=11 // pred_region
          _
        $region28: #{_lambda_.1} parent=11 // pred_fallthru
          _
        // Predicated region
        $region29: #{_lambda_.1} parent=11 // pred_check
          %p303 = pneg %p127
        $region30: #{_lambda_.1} parent=11 // pred_check_branch
          %305 = sbr.rel (%p303) target = $region32
        $region31: #{_lambda_.1} parent=11 // pred_region
          _
        $region32: #{_lambda_.1} parent=11 // pred_fallthru
          _
        // Predicated region
        $region33: #{_lambda_.1} parent=11 // pred_check
          %p306 = pneg %p148
        $region34: #{_lambda_.1} parent=11 // pred_check_branch
          %308 = sbr.rel (%p306) target = $region36
        $region35: #{_lambda_.1} parent=11 // pred_region
          _
        $region36: #{_lambda_.1} parent=11 // pred_fallthru
          _
        // Predicated region
        $region37: #{_lambda_.1} parent=11 // pred_check
          %p309 = pneg %p169
        $region38: #{_lambda_.1} parent=11 // pred_check_branch
          %311 = sbr.rel (%p309) target = $region40
        $region39: #{_lambda_.1} parent=11 // pred_region
          _
        $region40: #{_lambda_.1} parent=11 // pred_fallthru
          _
      $region12: #{_lambda_.1} parent=5 // pred_fallthru
        _
      %p312 = scmp.lt.s32.totalorder %s22, 2
      // Predicated region
      $region41: #{_lambda_.1} parent=5 // pred_check
        %p313 = pneg %p312
      $region42: #{_lambda_.1} parent=5 // pred_check_branch
        %315 = sbr.rel (%p313) target = $region44
      $region43: #{_lambda_.1} parent=5 // pred_region
        // Predicated region
        $region45: #{_lambda_.1} parent=43 // pred_check
          %p316 = pneg %p189
        $region46: #{_lambda_.1} parent=43 // pred_check_branch
          %318 = sbr.rel (%p316) target = $region48
        $region47: #{_lambda_.1} parent=43 // pred_region
          %s319 = sand.u32 %s179, 1
          %s320 = sand.u32 %s179, 1
          %s321 = smul.addr %s320, 384
          %s322 = scalar_lea.vmem [#allocation6], %s321
          %s323 = smul.u32 8, %s22
          %s324 = smul.addr %s323, 4
          %s325 = scalar_lea.vmem %s7, %s324
          // Predicated region
          $region49: #{_lambda_.1} parent=47 // pred_check
            _
          $region50: #{_lambda_.1} parent=47 // pred_check_branch
            %327 = sbr.rel (0) target = $region52
          $region51: #{_lambda_.1} parent=47 // pred_region
            // Predicated region
            $region53: #{_lambda_.1} parent=51 // pred_check
              _
            $region54: #{_lambda_.1} parent=51 // pred_check_branch
              %329 = sbr.rel (0) target = $region56
            $region55: #{_lambda_.1} parent=51 // pred_region
              loop: start=0, step=1, limit=1
              $region57: #{_lambda_.1} parent=55 // loop_pre_header
                _
              $region58: #{_lambda_.1} parent=55 // loop_header
                %s331 = sphi 0, %s335
                %p332 = scmp.ge.s32.totalorder %s331, 1
                %s336 = sphi %s325, %s325
                %s337 = sphi %s322, %s322
              $region59: #{_lambda_.1} parent=55 // loop_header_branch
                %334 = sbr.rel (%p332) target = $region63
              $region60: #{_lambda_.1} parent=55 // loop_body
                %v338 = vld [vmem:[%s336] sm:$0xff]
                %339 = vst [vmem:[%s337] sm:$0xff] %v338
                %v340 = vld [vmem:[%s336 + $0x8] sm:$0xff]
                %341 = vst [vmem:[%s337 + $0x8] sm:$0xff] %v340
                %v342 = vld [vmem:[%s336 + $0x10] sm:$0xff]
                %343 = vst [vmem:[%s337 + $0x10] sm:$0xff] %v342
                %v344 = vld [vmem:[%s336 + $0x18] sm:$0xff]
                %345 = vst [vmem:[%s337 + $0x18] sm:$0xff] %v344
                %v346 = vld [vmem:[%s336 + $0x40] sm:$0xff]
                %347 = vst [vmem:[%s337 + $0x20] sm:$0xff] %v346
                %v348 = vld [vmem:[%s336 + $0x48] sm:$0xff]
                %349 = vst [vmem:[%s337 + $0x28] sm:$0xff] %v348
                %v350 = vld [vmem:[%s336 + $0x50] sm:$0xff]
                %351 = vst [vmem:[%s337 + $0x30] sm:$0xff] %v350
                %v352 = vld [vmem:[%s336 + $0x58] sm:$0xff]
                %353 = vst [vmem:[%s337 + $0x38] sm:$0xff] %v352
                %v354 = vld [vmem:[%s336 + $0x80] sm:$0xff]
                %355 = vst [vmem:[%s337 + $0x40] sm:$0xff] %v354
                %v356 = vld [vmem:[%s336 + $0x88] sm:$0xff]
                %357 = vst [vmem:[%s337 + $0x48] sm:$0xff] %v356
                %v358 = vld [vmem:[%s336 + $0x90] sm:$0xff]
                %359 = vst [vmem:[%s337 + $0x50] sm:$0xff] %v358
                %v360 = vld [vmem:[%s336 + $0x98] sm:$0xff]
                %361 = vst [vmem:[%s337 + $0x58] sm:$0xff] %v360
                %v362 = vld [vmem:[%s336 + $0xc0] sm:$0xff]
                %363 = vst [vmem:[%s337 + $0x60] sm:$0xff] %v362
                %v364 = vld [vmem:[%s336 + $0xc8] sm:$0xff]
                %365 = vst [vmem:[%s337 + $0x68] sm:$0xff] %v364
                %v366 = vld [vmem:[%s336 + $0xd0] sm:$0xff]
                %367 = vst [vmem:[%s337 + $0x70] sm:$0xff] %v366
                %v368 = vld [vmem:[%s336 + $0xd8] sm:$0xff]
                %369 = vst [vmem:[%s337 + $0x78] sm:$0xff] %v368
                %v370 = vld [vmem:[%s336 + $0x100] sm:$0xff]
                %371 = vst [vmem:[%s337 + $0x80] sm:$0xff] %v370
                %v372 = vld [vmem:[%s336 + $0x108] sm:$0xff]
                %373 = vst [vmem:[%s337 + $0x88] sm:$0xff] %v372
                %v374 = vld [vmem:[%s336 + $0x110] sm:$0xff]
                %375 = vst [vmem:[%s337 + $0x90] sm:$0xff] %v374
                %v376 = vld [vmem:[%s336 + $0x118] sm:$0xff]
                %377 = vst [vmem:[%s337 + $0x98] sm:$0xff] %v376
                %v378 = vld [vmem:[%s336 + $0x140] sm:$0xff]
                %379 = vst [vmem:[%s337 + $0xa0] sm:$0xff] %v378
                %v380 = vld [vmem:[%s336 + $0x148] sm:$0xff]
                %381 = vst [vmem:[%s337 + $0xa8] sm:$0xff] %v380
                %v382 = vld [vmem:[%s336 + $0x150] sm:$0xff]
                %383 = vst [vmem:[%s337 + $0xb0] sm:$0xff] %v382
                %v384 = vld [vmem:[%s336 + $0x158] sm:$0xff]
                %385 = vst [vmem:[%s337 + $0xb8] sm:$0xff] %v384
                %v386 = vld [vmem:[%s336 + $0x180] sm:$0xff]
                %387 = vst [vmem:[%s337 + $0xc0] sm:$0xff] %v386
                %v388 = vld [vmem:[%s336 + $0x188] sm:$0xff]
                %389 = vst [vmem:[%s337 + $0xc8] sm:$0xff] %v388
                %v390 = vld [vmem:[%s336 + $0x190] sm:$0xff]
                %391 = vst [vmem:[%s337 + $0xd0] sm:$0xff] %v390
                %v392 = vld [vmem:[%s336 + $0x198] sm:$0xff]
                %393 = vst [vmem:[%s337 + $0xd8] sm:$0xff] %v392
                %v394 = vld [vmem:[%s336 + $0x1c0] sm:$0xff]
                %395 = vst [vmem:[%s337 + $0xe0] sm:$0xff] %v394
                %v396 = vld [vmem:[%s336 + $0x1c8] sm:$0xff]
                %397 = vst [vmem:[%s337 + $0xe8] sm:$0xff] %v396
                %v398 = vld [vmem:[%s336 + $0x1d0] sm:$0xff]
                %399 = vst [vmem:[%s337 + $0xf0] sm:$0xff] %v398
                %v400 = vld [vmem:[%s336 + $0x1d8] sm:$0xff]
                %401 = vst [vmem:[%s337 + $0xf8] sm:$0xff] %v400
                %v402 = vld [vmem:[%s336 + $0x200] sm:$0xff]
                %403 = vst [vmem:[%s337 + $0x100] sm:$0xff] %v402
                %v404 = vld [vmem:[%s336 + $0x208] sm:$0xff]
                %405 = vst [vmem:[%s337 + $0x108] sm:$0xff] %v404
                %v406 = vld [vmem:[%s336 + $0x210] sm:$0xff]
                %407 = vst [vmem:[%s337 + $0x110] sm:$0xff] %v406
                %v408 = vld [vmem:[%s336 + $0x218] sm:$0xff]
                %409 = vst [vmem:[%s337 + $0x118] sm:$0xff] %v408
                %v410 = vld [vmem:[%s336 + $0x240] sm:$0xff]
                %411 = vst [vmem:[%s337 + $0x120] sm:$0xff] %v410
                %v412 = vld [vmem:[%s336 + $0x248] sm:$0xff]
                %413 = vst [vmem:[%s337 + $0x128] sm:$0xff] %v412
                %v414 = vld [vmem:[%s336 + $0x250] sm:$0xff]
                %415 = vst [vmem:[%s337 + $0x130] sm:$0xff] %v414
                %v416 = vld [vmem:[%s336 + $0x258] sm:$0xff]
                %417 = vst [vmem:[%s337 + $0x138] sm:$0xff] %v416
                %v418 = vld [vmem:[%s336 + $0x280] sm:$0xff]
                %419 = vst [vmem:[%s337 + $0x140] sm:$0xff] %v418
                %v420 = vld [vmem:[%s336 + $0x288] sm:$0xff]
                %421 = vst [vmem:[%s337 + $0x148] sm:$0xff] %v420
                %v422 = vld [vmem:[%s336 + $0x290] sm:$0xff]
                %423 = vst [vmem:[%s337 + $0x150] sm:$0xff] %v422
                %v424 = vld [vmem:[%s336 + $0x298] sm:$0xff]
                %425 = vst [vmem:[%s337 + $0x158] sm:$0xff] %v424
                %v426 = vld [vmem:[%s336 + $0x2c0] sm:$0xff]
                %427 = vst [vmem:[%s337 + $0x160] sm:$0xff] %v426
                %v428 = vld [vmem:[%s336 + $0x2c8] sm:$0xff]
                %429 = vst [vmem:[%s337 + $0x168] sm:$0xff] %v428
                %v430 = vld [vmem:[%s336 + $0x2d0] sm:$0xff]
                %431 = vst [vmem:[%s337 + $0x170] sm:$0xff] %v430
                %v432 = vld [vmem:[%s336 + $0x2d8] sm:$0xff]
                %433 = vst [vmem:[%s337 + $0x178] sm:$0xff] %v432
              $region61: #{_lambda_.1} parent=55 // loop_footer
                %s335 = sadd.s32 1, %s331
              $region62: #{_lambda_.1} parent=55 // loop_footer_branch
                %330 = sbr.rel target = $region58
              $region63: #{_lambda_.1} parent=55 // loop_exit
                _
            $region56: #{_lambda_.1} parent=51 // pred_fallthru
              _
            // Predicated region
            $region64: #{_lambda_.1} parent=51 // pred_check
              _
            $region65: #{_lambda_.1} parent=51 // pred_check_branch
              %435 = sbr.rel target = $region67
            $region66: #{_lambda_.1} parent=51 // pred_region
              _
            $region67: #{_lambda_.1} parent=51 // pred_fallthru
              _
          $region52: #{_lambda_.1} parent=47 // pred_fallthru
            _
          %436 = vnop
        $region48: #{_lambda_.1} parent=43 // pred_fallthru
          _
        // Predicated region
        $region68: #{_lambda_.1} parent=43 // pred_check
          %p437 = pneg %p215
        $region69: #{_lambda_.1} parent=43 // pred_check_branch
          %439 = sbr.rel (%p437) target = $region71
        $region70: #{_lambda_.1} parent=43 // pred_region
          %s440 = smul.u32 8, %s22
          %p441 = scmp.lt.s32.totalorder %s440, 15
          %s442 = scalar_select %p441, %s440, 15
          %s443 = scalar_lea.vmem %s8, %s442
          %s444 = smul.u32 8, %s22
        $region71: #{_lambda_.1} parent=43 // pred_fallthru
          _
      $region44: #{_lambda_.1} parent=5 // pred_fallthru
        _
      %p445 = scmp.le.s32.totalorder 1, %s22
      %p446 = scmp.lt.s32.totalorder %s22, 3
      %p447 = pnand %p445, %p446
      %p448 = pneg %p447
      // Predicated region
      $region72: #{_lambda_.1} parent=5 // pred_check
        _
      $region73: #{_lambda_.1} parent=5 // pred_check_branch
        %450 = sbr.rel (%p447) target = $region75
      $region74: #{_lambda_.1} parent=5 // pred_region
        %s451 = ssub.s32 %s22, 1
        // Predicated region
        $region76: #{_lambda_.1} parent=74 // pred_check
          %p452 = pneg %p85
        $region77: #{_lambda_.1} parent=74 // pred_check_branch
          %454 = sbr.rel (%p452) target = $region79
        $region78: #{_lambda_.1} parent=74 // pred_region
          %455 = dma.done [#allocation4], 128
        $region79: #{_lambda_.1} parent=74 // pred_fallthru
          _
        %s456 = sand.u32 %s182, 1
        %s457 = sand.u32 %s182, 1
        %s458 = smul.addr %s457, 384
        %s459 = scalar_lea.vmem [#allocation6], %s458
        // Predicated region
        $region80: #{_lambda_.1} parent=74 // pred_check
          %p460 = pneg %p195
        $region81: #{_lambda_.1} parent=74 // pred_check_branch
          %462 = sbr.rel (%p460) target = $region83
        $region82: #{_lambda_.1} parent=74 // pred_region
          _
        $region83: #{_lambda_.1} parent=74 // pred_fallthru
          _
        %p463 = pneg %p43
        %p464 = pneg %p40
        %p465 = pneg %p64
        %p466 = pneg %p61
        %p467 = pneg %p85
        %p468 = pneg %p82
        %p469 = pneg %p106
        %p470 = pneg %p103
        %p471 = pneg %p127
        %p472 = pneg %p124
        %p473 = pneg %p148
        %p474 = pneg %p145
        %p475 = pneg %p169
        %p476 = pneg %p166
        %s477 = sand.u32 %s182, 1
        %s478 = sand.u32 %s182, 1
        %s479 = smul.addr %s478, 384
        %s480 = scalar_lea.vmem [#allocation6], %s479
        %p481 = pneg %p195
        %p482 = pneg %p192
        %s483 = smul.u32 8, %s27
        %p484 = scmp.lt.s32.totalorder %s483, 15
        %s485 = scalar_select %p484, %s483, 15
        %s486 = scalar_lea.vmem %s8, %s485
        %p487 = pneg %p221
        %p488 = pneg %p218
        %p489 = pneg %p247
        %p490 = pneg %p244
        %s491 = sand.u32 %s234, 1
        %s492 = scalar_lea.sflag [#allocation5], %s491
        %s493 = sand.u32 %s234, 1
        %s494 = smul.addr %s493, 64
        %s495 = scalar_lea.vmem [#allocation7], %s494
        %p496 = pneg %p268
        %p497 = pneg %p265
        %s498 = smul.u32 8, %s27
        %s499 = smul.u32 8, %s27
        %p500 = scmp.lt.s32.totalorder %s499, 15
        %s501 = scalar_select %p500, %s499, 15
        %s502 = scalar_lea.vmem %s8, %s501
        %s503 = smul.u32 8, %s27
        %s504 = smul.u32 8, %s27
        %p506 = scmp.eq.s32.totalorder %s27, 0
        // Predicated region
        $region84: #{_lambda_.1} parent=74 // pred_check
          %p507 = pneg %p506
        $region85: #{_lambda_.1} parent=74 // pred_check_branch
          %509 = sbr.rel (%p507) target = $region87
        $region86: #{_lambda_.1} parent=74 // pred_region
          %v510 = vld [vmem:[%s0] sm:$0xff]
          %v511 = vld [vmem:[%s1] sm:$0x1]
          %v512 = vld [vmem:[%s1 + $0x1] sm:$0x1]
          %v513 = vld [vmem:[%s1 + $0x2] sm:$0x1]
          %v514 = vld [vmem:[%s1 + $0x3] sm:$0x1]
          %v515 = vld [vmem:[%s1 + $0x4] sm:$0x1]
          %v516 = vld [vmem:[%s1 + $0x5] sm:$0x1]
          %v517 = vld [vmem:[%s1 + $0x6] sm:$0x1]
          %v518 = vld [vmem:[%s1 + $0x7] sm:$0x1]
          %v519 = vld [vmem:[#allocation3] sm:$0xff]
          %v528 = vcombine.low %v511, %v512
          %v529 = vcombine.low %v513, %v514
          %v530 = vcombine.low %v515, %v516
          %v531 = vcombine.low %v517, %v518
          %v533 = vunpack.c.l.s4 1966171168
          %v534 = vunpack.c.0.s8 %v533
          %v535 = vlaneseq
          %v536 = vshrl.u32 %v535, 7
          %v537 = vsub.s32 %v534, %v536
          %v538 = vrot.slane %v528, %v537
          %v540 = vunpack.c.l.s4 1966171168
          %v541 = vunpack.c.0.s8 %v540
          %v542 = vlaneseq
          %v543 = vshrl.u32 %v542, 7
          %v544 = vsub.s32 %v541, %v543
          %v545 = vrot.slane %v529, %v544
          %v547 = vunpack.c.l.s4 1966171168
          %v548 = vunpack.c.0.s8 %v547
          %v549 = vlaneseq
          %v550 = vshrl.u32 %v549, 7
          %v551 = vsub.s32 %v548, %v550
          %v552 = vrot.slane %v530, %v551
          %v554 = vunpack.c.l.s4 1966171168
          %v555 = vunpack.c.0.s8 %v554
          %v556 = vlaneseq
          %v557 = vshrl.u32 %v556, 7
          %v558 = vsub.s32 %v555, %v557
          %v559 = vrot.slane %v531, %v558
          %v560 = vcombine.low %v538, %v545
          %v561 = vcombine.low %v552, %v559
          %v563 = vunpack.c.l.s4 1966171168
          %v564 = vunpack.c.0.s8 %v563
          %v565 = vlaneseq
          %v566 = vshrl.u32 %v565, 7
          %v567 = vsub.s32 %v564, %v566
          %v568 = vrot.slane %v560, %v567
          %v570 = vunpack.c.l.s4 1966171168
          %v571 = vunpack.c.0.s8 %v570
          %v572 = vlaneseq
          %v573 = vshrl.u32 %v572, 7
          %v574 = vsub.s32 %v571, %v573
          %v575 = vrot.slane %v561, %v574
          %v576 = vcombine.low %v568, %v575
          %577 = vrot.lane.b32.xlu0 %v576, 32
          %v578 = vpop.permute.xlu0 %577
          %vm580 = vcmask 261120
          %v581 = vsel %vm580, %v510, %v578
          %v582 = vpack.c.bf16 %v581, %v581
          %v583 = vld [vmem:[%s3] sm:$0xff]
          %v584 = vld [vmem:[%s3 + $0x8] sm:$0xf]
          %v585 = vld [vmem:[%s3 + $0xc] sm:$0xff]
          %v586 = vld [vmem:[%s3 + $0x14] sm:$0xf]
          %v587 = vld [vmem:[%s3 + $0x18] sm:$0xff]
          %v588 = vld [vmem:[%s3 + $0x20] sm:$0xf]
          %v589 = vld [vmem:[%s3 + $0x24] sm:$0xff]
          %v590 = vld [vmem:[%s3 + $0x2c] sm:$0xf]
          %v591 = vld [vmem:[%s3 + $0x30] sm:$0xff]
          %v592 = vld [vmem:[%s3 + $0x38] sm:$0xf]
          %v593 = vld [vmem:[%s3 + $0x3c] sm:$0xff]
          %v594 = vld [vmem:[%s3 + $0x44] sm:$0xf]
          %v595 = vld [vmem:[%s3 + $0x48] sm:$0xff]
          %v596 = vld [vmem:[%s3 + $0x50] sm:$0xf]
          %v597 = vld [vmem:[%s3 + $0x54] sm:$0xff]
          %v598 = vld [vmem:[%s3 + $0x5c] sm:$0xf]
          %v599 = vld [vmem:[%s4] sm:$0x7]
          %v601 = vlaneseq
          %v602 = vshrl.u32 %v601, 7
          %v603 = vsub.s32 0, %v602
          %v604 = vrot.slane %v599, %v603
          %v605 = vlaneseq
          %v606 = vshrl.u32 %v605, 7
          %v607 = vsub.s32 1, %v606
          %v608 = vrot.slane %v599, %v607
          %v609 = vlaneseq
          %v610 = vshrl.u32 %v609, 7
          %v611 = vsub.s32 2, %v610
          %v612 = vrot.slane %v599, %v611
          %v632 = vunpack.c.l.b16 %v583
          %v633 = vunpack.c.h.b16 %v583
          %v634 = vunpack.c.l.b16 %v584
          %v635 = vunpack.c.l.b16 %v585
          %v636 = vunpack.c.h.b16 %v585
          %v637 = vunpack.c.l.b16 %v586
          %v638 = vunpack.c.l.b16 %v587
          %v639 = vunpack.c.h.b16 %v587
          %v640 = vunpack.c.l.b16 %v588
          %v641 = vunpack.c.l.b16 %v589
          %v642 = vunpack.c.h.b16 %v589
          %v643 = vunpack.c.l.b16 %v590
          %v644 = vunpack.c.l.b16 %v591
          %v645 = vunpack.c.h.b16 %v591
          %v646 = vunpack.c.l.b16 %v592
          %v647 = vunpack.c.l.b16 %v593
          %v648 = vunpack.c.h.b16 %v593
          %v649 = vunpack.c.l.b16 %v594
          %v650 = vunpack.c.l.b16 %v595
          %v651 = vunpack.c.h.b16 %v595
          %v652 = vunpack.c.l.b16 %v596
          %v653 = vunpack.c.l.b16 %v597
          %v654 = vunpack.c.h.b16 %v597
          %v655 = vunpack.c.l.b16 %v598
          %v656 = vpack.c.b16 %v635, %v632
          %v657 = vpack.c.b16 %v636, %v633
          %v658 = vpack.c.b16 %v637, %v634
          %v659 = vpack.c.b16 %v641, %v638
          %v660 = vpack.c.b16 %v642, %v639
          %v661 = vpack.c.b16 %v643, %v640
          %v662 = vpack.c.b16 %v647, %v644
          %v663 = vpack.c.b16 %v648, %v645
          %v664 = vpack.c.b16 %v649, %v646
          %v665 = vpack.c.b16 %v653, %v650
          %v666 = vpack.c.b16 %v654, %v651
          %v667 = vpack.c.b16 %v655, %v652
          %vm680 = vcmask 523264
          %v682 = vsel %vm680, %v582, 0
          %684 = vmatprep.subr.bf16.mxu0 %v657
          %685 = vmatpush1.bf16.msra.mxu0 %v656
          %686 = vmatprep.subr.bf16.mxu0 %v660
          %687 = vmatpush1.bf16.msra.mxu0 %v659
          %688 = vmatprep.subr.bf16.mxu0 %v663
          %689 = vmatpush1.bf16.msra.mxu0 %v662
          %690 = vmatprep.subr.bf16.mxu0 %v666
          %691 = vmatpush1.bf16.msra.mxu0 %v665
          %692 = vmatprep.subr.bf16.mxu0 0
          %693 = vmatpush1.bf16.msra.mxu0 0
          %694 = vmatprep.subr.bf16.mxu0 0
          %695 = vmatpush1.bf16.msra.mxu0 0
          %696 = vmatprep.subr.bf16.mxu0 0
          %697 = vmatpush1.bf16.msra.mxu0 0
          %698 = vmatprep.subr.bf16.mxu0 0
          %699 = vmatpush1.bf16.msra.mxu0 0
          %700 = vmatprep.subr.bf16.mxu0 0
          %701 = vmatpush1.bf16.msra.mxu0 0
          %702 = vmatprep.subr.bf16.mxu0 0
          %703 = vmatpush1.bf16.msra.mxu0 0
          %704 = vmatprep.subr.bf16.mxu0 0
          %705 = vmatpush1.bf16.msra.mxu0 0
          %706 = vmatprep.subr.bf16.mxu0 0
          %707 = vmatpush1.bf16.msra.mxu0 0
          %708 = vmatprep.subr.bf16.mxu0 0
          %709 = vmatpush1.bf16.msra.mxu0 0
          %710 = vmatprep.subr.bf16.mxu0 0
          %711 = vmatpush1.bf16.msra.mxu0 0
          %712 = vmatprep.subr.bf16.mxu0 0
          %713 = vmatpush1.bf16.msra.mxu0 0
          %714 = vmatprep.subr.bf16.mxu0 0
          %715 = vmatpush1.bf16.msra.mxu0 0
          %716 = vmatprep.mubr.bf16.mxu0 0
          %717 = vmatmul.mubr.bf16.gmra.mrb[0].mxu0 %v682
          %v718 = vpop.f32.mrb[0].mxu0
          %v719 = vadd.f32 %v604, %v718
          %v720 = vpop.f32.mrb[0].mxu0
          %v721 = vadd.f32 %v608, %v720
          %v722 = vpop.f32.mrb[0].mxu0
          %v723 = vpop.f32.mrb[0].mxu0
          %724 = vdwg.mxu0
          %725 = vmatprep.subr.bf16.mxu0 0
          %726 = vmatpush1.bf16.msra.mxu0 %v658
          %727 = vmatprep.subr.bf16.mxu0 0
          %728 = vmatpush1.bf16.msra.mxu0 %v661
          %729 = vmatprep.subr.bf16.mxu0 0
          %730 = vmatpush1.bf16.msra.mxu0 %v664
          %731 = vmatprep.subr.bf16.mxu0 0
          %732 = vmatpush1.bf16.msra.mxu0 %v667
          %733 = vmatprep.subr.bf16.mxu0 0
          %734 = vmatpush1.bf16.msra.mxu0 0
          %735 = vmatprep.subr.bf16.mxu0 0
          %736 = vmatpush1.bf16.msra.mxu0 0
          %737 = vmatprep.subr.bf16.mxu0 0
          %738 = vmatpush1.bf16.msra.mxu0 0
          %739 = vmatprep.subr.bf16.mxu0 0
          %740 = vmatpush1.bf16.msra.mxu0 0
          %741 = vmatprep.subr.bf16.mxu0 0
          %742 = vmatpush1.bf16.msra.mxu0 0
          %743 = vmatprep.subr.bf16.mxu0 0
          %744 = vmatpush1.bf16.msra.mxu0 0
          %745 = vmatprep.subr.bf16.mxu0 0
          %746 = vmatpush1.bf16.msra.mxu0 0
          %747 = vmatprep.subr.bf16.mxu0 0
          %748 = vmatpush1.bf16.msra.mxu0 0
          %749 = vmatprep.subr.bf16.mxu0 0
          %750 = vmatpush1.bf16.msra.mxu0 0
          %751 = vmatprep.subr.bf16.mxu0 0
          %752 = vmatpush1.bf16.msra.mxu0 0
          %753 = vmatprep.subr.bf16.mxu0 0
          %754 = vmatpush1.bf16.msra.mxu0 0
          %755 = vmatprep.subr.bf16.mxu0 0
          %756 = vmatpush1.bf16.msra.mxu0 0
          %757 = vmatprep.mubr.bf16.mxu0 0
          %758 = vmatmul.mubr.bf16.gmra.mrb[0].mxu0 %v682
          %v759 = vpop.f32.mrb[0].mxu0
          %v760 = vadd.f32 %v612, %v759
          %v761 = vpop.f32.mrb[0].mxu0
          %v762 = vpop.f32.mrb[0].mxu0
          %v763 = vpop.f32.mrb[0].mxu0
          %764 = vdwg.mxu0
          %v765 = vld [vmem:[%s5] sm:$0xff]
          %v766 = vld [vmem:[%s5 + $0x8] sm:$0xff]
          %v767 = vld [vmem:[%s5 + $0x10] sm:$0xff]
          %v768 = vld [vmem:[%s5 + $0x18] sm:$0xff]
          %v769 = vld [vmem:[%s5 + $0x20] sm:$0xff]
          %v770 = vld [vmem:[%s5 + $0x28] sm:$0xff]
          %v771 = vld [vmem:[%s5 + $0x30] sm:$0xff]
          %v772 = vld [vmem:[%s5 + $0x38] sm:$0xff]
          %v773 = vld [vmem:[%s5 + $0x40] sm:$0xff]
          %v774 = vld [vmem:[%s5 + $0x48] sm:$0xff]
          %v775 = vld [vmem:[%s5 + $0x50] sm:$0xff]
          %v776 = vld [vmem:[%s5 + $0x58] sm:$0xff]
          %v777 = vld [vmem:[%s6] sm:$0x7]
          %v779 = vlaneseq
          %v780 = vshrl.u32 %v779, 7
          %v781 = vsub.s32 0, %v780
          %v782 = vrot.slane %v777, %v781
          %v783 = vlaneseq
          %v784 = vshrl.u32 %v783, 7
          %v785 = vsub.s32 1, %v784
          %v786 = vrot.slane %v777, %v785
          %v787 = vlaneseq
          %v788 = vshrl.u32 %v787, 7
          %v789 = vsub.s32 2, %v788
          %v790 = vrot.slane %v777, %v789
          %v795 = vsel %vm580, %v519, 0
          %797 = vmatprep.subr.mxu0 %v766
          %798 = vmatpush1.msra.mxu0 %v765
          %799 = vmatprep.subr.mxu0 %v769
          %800 = vmatpush1.msra.mxu0 %v768
          %801 = vmatprep.subr.mxu0 %v772
          %802 = vmatpush1.msra.mxu0 %v771
          %803 = vmatprep.subr.mxu0 %v775
          %804 = vmatpush1.msra.mxu0 %v774
          %805 = vmatprep.subr.mxu0 0.0
          %806 = vmatpush1.msra.mxu0 0.0
          %807 = vmatprep.subr.mxu0 0.0
          %808 = vmatpush1.msra.mxu0 0.0
          %809 = vmatprep.subr.mxu0 0.0
          %810 = vmatpush1.msra.mxu0 0.0
          %811 = vmatprep.subr.mxu0 0.0
          %812 = vmatpush1.msra.mxu0 0.0
          %813 = vmatprep.subr.mxu0 0.0
          %814 = vmatpush1.msra.mxu0 0.0
          %815 = vmatprep.subr.mxu0 0.0
          %816 = vmatpush1.msra.mxu0 0.0
          %817 = vmatprep.subr.mxu0 0.0
          %818 = vmatpush1.msra.mxu0 0.0
          %819 = vmatprep.subr.mxu0 0.0
          %820 = vmatpush1.msra.mxu0 0.0
          %821 = vmatprep.subr.mxu0 0.0
          %822 = vmatpush1.msra.mxu0 0.0
          %823 = vmatprep.subr.mxu0 0.0
          %824 = vmatpush1.msra.mxu0 0.0
          %825 = vmatprep.subr.mxu0 0.0
          %826 = vmatpush1.msra.mxu0 0.0
          %827 = vmatprep.subr.mxu0 0.0
          %828 = vmatpush1.msra.mxu0 0.0
          %829 = vmatprep.subr.mxu0 0.0
          %830 = vmatpush1.msra.mxu0 0.0
          %831 = vmatprep.subr.mxu0 0.0
          %832 = vmatpush1.msra.mxu0 0.0
          %833 = vmatprep.subr.mxu0 0.0
          %834 = vmatpush1.msra.mxu0 0.0
          %835 = vmatprep.subr.mxu0 0.0
          %836 = vmatpush1.msra.mxu0 0.0
          %837 = vmatprep.subr.mxu0 0.0
          %838 = vmatpush1.msra.mxu0 0.0
          %839 = vmatprep.subr.mxu0 0.0
          %840 = vmatpush1.msra.mxu0 0.0
          %841 = vmatprep.subr.mxu0 0.0
          %842 = vmatpush1.msra.mxu0 0.0
          %843 = vmatprep.subr.mxu0 0.0
          %844 = vmatpush1.msra.mxu0 0.0
          %845 = vmatprep.subr.mxu0 0.0
          %846 = vmatpush1.msra.mxu0 0.0
          %847 = vmatprep.subr.mxu0 0.0
          %848 = vmatpush1.msra.mxu0 0.0
          %849 = vmatprep.subr.mxu0 0.0
          %850 = vmatpush1.msra.mxu0 0.0
          %851 = vmatprep.subr.mxu0 0.0
          %852 = vmatpush1.msra.mxu0 0.0
          %853 = vmatprep.subr.mxu0 0.0
          %854 = vmatpush1.msra.mxu0 0.0
          %855 = vmatprep.subr.mxu0 0.0
          %856 = vmatpush1.msra.mxu0 0.0
          %857 = vmatprep.subr.mxu0 0.0
          %858 = vmatpush1.msra.mxu0 0.0
          %859 = vmatprep.subr.mxu0 0.0
          %860 = vmatpush1.msra.mxu0 0.0
          %861 = vmatprep.mubr.f32.mxu0 0.0
          %862 = vmatmul.mubr.f32.gmra.mrb[0].mxu0 %v795
          %v863 = vpop.f32.mrb[0].mxu0
          %v864 = vadd.f32 %v782, %v863
          %v865 = vpop.f32.mrb[0].mxu0
          %v866 = vadd.f32 %v786, %v865
          %867 = vdwg.mxu0
          %868 = vmatprep.subr.mxu0 0.0
          %869 = vmatpush1.msra.mxu0 %v767
          %870 = vmatprep.subr.mxu0 0.0
          %871 = vmatpush1.msra.mxu0 %v770
          %872 = vmatprep.subr.mxu0 0.0
          %873 = vmatpush1.msra.mxu0 %v773
          %874 = vmatprep.subr.mxu0 0.0
          %875 = vmatpush1.msra.mxu0 %v776
          %876 = vmatprep.subr.mxu0 0.0
          %877 = vmatpush1.msra.mxu0 0.0
          %878 = vmatprep.subr.mxu0 0.0
          %879 = vmatpush1.msra.mxu0 0.0
          %880 = vmatprep.subr.mxu0 0.0
          %881 = vmatpush1.msra.mxu0 0.0
          %882 = vmatprep.subr.mxu0 0.0
          %883 = vmatpush1.msra.mxu0 0.0
          %884 = vmatprep.subr.mxu0 0.0
          %885 = vmatpush1.msra.mxu0 0.0
          %886 = vmatprep.subr.mxu0 0.0
          %887 = vmatpush1.msra.mxu0 0.0
          %888 = vmatprep.subr.mxu0 0.0
          %889 = vmatpush1.msra.mxu0 0.0
          %890 = vmatprep.subr.mxu0 0.0
          %891 = vmatpush1.msra.mxu0 0.0
          %892 = vmatprep.subr.mxu0 0.0
          %893 = vmatpush1.msra.mxu0 0.0
          %894 = vmatprep.subr.mxu0 0.0
          %895 = vmatpush1.msra.mxu0 0.0
          %896 = vmatprep.subr.mxu0 0.0
          %897 = vmatpush1.msra.mxu0 0.0
          %898 = vmatprep.subr.mxu0 0.0
          %899 = vmatpush1.msra.mxu0 0.0
          %900 = vmatprep.subr.mxu0 0.0
          %901 = vmatpush1.msra.mxu0 0.0
          %902 = vmatprep.subr.mxu0 0.0
          %903 = vmatpush1.msra.mxu0 0.0
          %904 = vmatprep.subr.mxu0 0.0
          %905 = vmatpush1.msra.mxu0 0.0
          %906 = vmatprep.subr.mxu0 0.0
          %907 = vmatpush1.msra.mxu0 0.0
          %908 = vmatprep.subr.mxu0 0.0
          %909 = vmatpush1.msra.mxu0 0.0
          %910 = vmatprep.subr.mxu0 0.0
          %911 = vmatpush1.msra.mxu0 0.0
          %912 = vmatprep.subr.mxu0 0.0
          %913 = vmatpush1.msra.mxu0 0.0
          %914 = vmatprep.subr.mxu0 0.0
          %915 = vmatpush1.msra.mxu0 0.0
          %916 = vmatprep.subr.mxu0 0.0
          %917 = vmatpush1.msra.mxu0 0.0
          %918 = vmatprep.subr.mxu0 0.0
          %919 = vmatpush1.msra.mxu0 0.0
          %920 = vmatprep.subr.mxu0 0.0
          %921 = vmatpush1.msra.mxu0 0.0
          %922 = vmatprep.subr.mxu0 0.0
          %923 = vmatpush1.msra.mxu0 0.0
          %924 = vmatprep.subr.mxu0 0.0
          %925 = vmatpush1.msra.mxu0 0.0
          %926 = vmatprep.subr.mxu0 0.0
          %927 = vmatpush1.msra.mxu0 0.0
          %928 = vmatprep.subr.mxu0 0.0
          %929 = vmatpush1.msra.mxu0 0.0
          %930 = vmatprep.subr.mxu0 0.0
          %931 = vmatpush1.msra.mxu0 0.0
          %932 = vmatprep.mubr.f32.mxu0 0.0
          %933 = vmatmul.mubr.f32.gmra.mrb[0].mxu0 %v795
          %v934 = vpop.f32.mrb[0].mxu0
          %v935 = vadd.f32 %v790, %v934
          %v936 = vpop.f32.mrb[0].mxu0
          %937 = vdwg.mxu0
          %v938 = vadd.f32 %v719, %v864
          %v939 = vxor.u32 %v938, 2147483648
          %v940 = vmul.f32 %v939, 1.442695
          %v941 = vpow.pop %v940
          %v942 = vadd.f32 %v941, 1.0
          %v943 = vrcp.pop %v942
          %v944 = vmul.f32 1.0, %v943
          %v945 = vadd.f32 %v721, %v866
          %v946 = vxor.u32 %v945, 2147483648
          %v947 = vmul.f32 %v946, 1.442695
          %v948 = vpow.pop %v947
          %v949 = vadd.f32 %v948, 1.0
          %v950 = vrcp.pop %v949
          %v951 = vmul.f32 1.0, %v950
          %v952 = vmul.f32 %v944, %v935
          %v953 = vadd.f32 %v760, %v952
          %v954 = vtanh.pop %v953
          %v955 = vsel %vm580, %v519, 0.0
          %v956 = vsub.f32 1.0, %v951
          %v957 = vmul.f32 %v956, %v954
          %v958 = vmul.f32 %v951, %v955
          %v959 = vadd.f32 %v957, %v958
          %960 = vst.msk [vmem:[#allocation8] sm:$0xff] %vm580, %v959
          %962 = vrot.lane.b32.xlu0 %v959, 64
          %v963 = vpop.permute.xlu0 %962
          %v965 = vsel %vm680, %v581, %v963
          %v966 = vpack.c.bf16 %v965, %v965
          %vm967 = vcmask 781312
          %968 = vst.msk [vmem:[#allocation2] sm:$0xf] %vm967, %v966
        $region87: #{_lambda_.1} parent=74 // pred_fallthru
          _
        %v969 = vld [vmem:[#allocation2] sm:$0xf]
        %v970 = vld [vmem:[%s459] sm:$0xff]
        %v971 = vld [vmem:[%s459 + $0x8] sm:$0xff]
        %v972 = vld [vmem:[%s459 + $0x10] sm:$0xff]
        %v973 = vld [vmem:[%s459 + $0x18] sm:$0xff]
        %v974 = vld [vmem:[%s459 + $0x20] sm:$0xff]
        %v975 = vld [vmem:[%s459 + $0x28] sm:$0xff]
        %v976 = vld [vmem:[%s459 + $0x30] sm:$0xff]
        %v977 = vld [vmem:[%s459 + $0x38] sm:$0xff]
        %v978 = vld [vmem:[%s459 + $0x40] sm:$0xff]
        %v979 = vld [vmem:[%s459 + $0x48] sm:$0xff]
        %v980 = vld [vmem:[%s459 + $0x50] sm:$0xff]
        %v981 = vld [vmem:[%s459 + $0x58] sm:$0xff]
        %v982 = vld [vmem:[%s459 + $0x60] sm:$0xff]
        %v983 = vld [vmem:[%s459 + $0x68] sm:$0xff]
        %v984 = vld [vmem:[%s459 + $0x70] sm:$0xff]
        %v985 = vld [vmem:[%s459 + $0x78] sm:$0xff]
        %v986 = vld [vmem:[%s459 + $0x80] sm:$0xff]
        %v987 = vld [vmem:[%s459 + $0x88] sm:$0xff]
        %v988 = vld [vmem:[%s459 + $0x90] sm:$0xff]
        %v989 = vld [vmem:[%s459 + $0x98] sm:$0xff]
        %v990 = vld [vmem:[%s459 + $0xa0] sm:$0xff]
        %v991 = vld [vmem:[%s459 + $0xa8] sm:$0xff]
        %v992 = vld [vmem:[%s459 + $0xb0] sm:$0xff]
        %v993 = vld [vmem:[%s459 + $0xb8] sm:$0xff]
        %v994 = vld [vmem:[%s459 + $0xc0] sm:$0xff]
        %v995 = vld [vmem:[%s459 + $0xc8] sm:$0xff]
        %v996 = vld [vmem:[%s459 + $0xd0] sm:$0xff]
        %v997 = vld [vmem:[%s459 + $0xd8] sm:$0xff]
        %v998 = vld [vmem:[%s459 + $0xe0] sm:$0xff]
        %v999 = vld [vmem:[%s459 + $0xe8] sm:$0xff]
        %v1000 = vld [vmem:[%s459 + $0xf0] sm:$0xff]
        %v1001 = vld [vmem:[%s459 + $0xf8] sm:$0xff]
        %v1002 = vld [vmem:[%s459 + $0x100] sm:$0xff]
        %v1003 = vld [vmem:[%s459 + $0x108] sm:$0xff]
        %v1004 = vld [vmem:[%s459 + $0x110] sm:$0xff]
        %v1005 = vld [vmem:[%s459 + $0x118] sm:$0xff]
        %v1006 = vld [vmem:[%s459 + $0x120] sm:$0xff]
        %v1007 = vld [vmem:[%s459 + $0x128] sm:$0xff]
        %v1008 = vld [vmem:[%s459 + $0x130] sm:$0xff]
        %v1009 = vld [vmem:[%s459 + $0x138] sm:$0xff]
        %v1010 = vld [vmem:[%s459 + $0x140] sm:$0xff]
        %v1011 = vld [vmem:[%s459 + $0x148] sm:$0xff]
        %v1012 = vld [vmem:[%s459 + $0x150] sm:$0xff]
        %v1013 = vld [vmem:[%s459 + $0x158] sm:$0xff]
        %v1014 = vld [vmem:[%s459 + $0x160] sm:$0xff]
        %v1015 = vld [vmem:[%s459 + $0x168] sm:$0xff]
        %v1016 = vld [vmem:[%s459 + $0x170] sm:$0xff]
        %v1017 = vld [vmem:[%s459 + $0x178] sm:$0xff]
        %v1018 = vld [vmem:[%s502] sm:$0xff]
        %v1020 = vlaneseq
        %v1021 = vshrl.u32 %v1020, 7
        %v1022 = vsub.s32 0, %v1021
        %v1023 = vrot.slane %v1018, %v1022
        %v1024 = vlaneseq
        %v1025 = vshrl.u32 %v1024, 7
        %v1026 = vsub.s32 1, %v1025
        %v1027 = vrot.slane %v1018, %v1026
        %v1028 = vlaneseq
        %v1029 = vshrl.u32 %v1028, 7
        %v1030 = vsub.s32 2, %v1029
        %v1031 = vrot.slane %v1018, %v1030
        %v1032 = vlaneseq
        %v1033 = vshrl.u32 %v1032, 7
        %v1034 = vsub.s32 3, %v1033
        %v1035 = vrot.slane %v1018, %v1034
        %v1036 = vlaneseq
        %v1037 = vshrl.u32 %v1036, 7
        %v1038 = vsub.s32 4, %v1037
        %v1039 = vrot.slane %v1018, %v1038
        %v1040 = vlaneseq
        %v1041 = vshrl.u32 %v1040, 7
        %v1042 = vsub.s32 5, %v1041
        %v1043 = vrot.slane %v1018, %v1042
        %v1044 = vlaneseq
        %v1045 = vshrl.u32 %v1044, 7
        %v1046 = vsub.s32 6, %v1045
        %v1047 = vrot.slane %v1018, %v1046
        %v1048 = vlaneseq
        %v1049 = vshrl.u32 %v1048, 7
        %v1050 = vsub.s32 7, %v1049
        %v1051 = vrot.slane %v1018, %v1050
        %v1108 = vunpack.c.l.b16 %v970
        %v1109 = vunpack.c.h.b16 %v970
        %v1110 = vunpack.c.l.b16 %v971
        %v1111 = vunpack.c.h.b16 %v971
        %v1112 = vunpack.c.l.b16 %v972
        %v1113 = vunpack.c.h.b16 %v972
        %v1114 = vunpack.c.l.b16 %v973
        %v1115 = vunpack.c.h.b16 %v973
        %v1116 = vunpack.c.l.b16 %v974
        %v1117 = vunpack.c.h.b16 %v974
        %v1118 = vunpack.c.l.b16 %v975
        %v1119 = vunpack.c.h.b16 %v975
        %v1120 = vunpack.c.l.b16 %v976
        %v1121 = vunpack.c.h.b16 %v976
        %v1122 = vunpack.c.l.b16 %v977
        %v1123 = vunpack.c.h.b16 %v977
        %v1124 = vunpack.c.l.b16 %v978
        %v1125 = vunpack.c.h.b16 %v978
        %v1126 = vunpack.c.l.b16 %v979
        %v1127 = vunpack.c.h.b16 %v979
        %v1128 = vunpack.c.l.b16 %v980
        %v1129 = vunpack.c.h.b16 %v980
        %v1130 = vunpack.c.l.b16 %v981
        %v1131 = vunpack.c.h.b16 %v981
        %v1132 = vunpack.c.l.b16 %v982
        %v1133 = vunpack.c.h.b16 %v982
        %v1134 = vunpack.c.l.b16 %v983
        %v1135 = vunpack.c.h.b16 %v983
        %v1136 = vunpack.c.l.b16 %v984
        %v1137 = vunpack.c.h.b16 %v984
        %v1138 = vunpack.c.l.b16 %v985
        %v1139 = vunpack.c.h.b16 %v985
        %v1140 = vunpack.c.l.b16 %v986
        %v1141 = vunpack.c.h.b16 %v986
        %v1142 = vunpack.c.l.b16 %v987
        %v1143 = vunpack.c.h.b16 %v987
        %v1144 = vunpack.c.l.b16 %v988
        %v1145 = vunpack.c.h.b16 %v988
        %v1146 = vunpack.c.l.b16 %v989
        %v1147 = vunpack.c.h.b16 %v989
        %v1148 = vunpack.c.l.b16 %v990
        %v1149 = vunpack.c.h.b16 %v990
        %v1150 = vunpack.c.l.b16 %v991
        %v1151 = vunpack.c.h.b16 %v991
        %v1152 = vunpack.c.l.b16 %v992
        %v1153 = vunpack.c.h.b16 %v992
        %v1154 = vunpack.c.l.b16 %v993
        %v1155 = vunpack.c.h.b16 %v993
        %v1156 = vunpack.c.l.b16 %v994
        %v1157 = vunpack.c.h.b16 %v994
        %v1158 = vunpack.c.l.b16 %v995
        %v1159 = vunpack.c.h.b16 %v995
        %v1160 = vunpack.c.l.b16 %v996
        %v1161 = vunpack.c.h.b16 %v996
        %v1162 = vunpack.c.l.b16 %v997
        %v1163 = vunpack.c.h.b16 %v997
        %v1164 = vunpack.c.l.b16 %v998
        %v1165 = vunpack.c.h.b16 %v998
        %v1166 = vunpack.c.l.b16 %v999
        %v1167 = vunpack.c.h.b16 %v999
        %v1168 = vunpack.c.l.b16 %v1000
        %v1169 = vunpack.c.h.b16 %v1000
        %v1170 = vunpack.c.l.b16 %v1001
        %v1171 = vunpack.c.h.b16 %v1001
        %v1172 = vunpack.c.l.b16 %v1002
        %v1173 = vunpack.c.h.b16 %v1002
        %v1174 = vunpack.c.l.b16 %v1003
        %v1175 = vunpack.c.h.b16 %v1003
        %v1176 = vunpack.c.l.b16 %v1004
        %v1177 = vunpack.c.h.b16 %v1004
        %v1178 = vunpack.c.l.b16 %v1005
        %v1179 = vunpack.c.h.b16 %v1005
        %v1180 = vunpack.c.l.b16 %v1006
        %v1181 = vunpack.c.h.b16 %v1006
        %v1182 = vunpack.c.l.b16 %v1007
        %v1183 = vunpack.c.h.b16 %v1007
        %v1184 = vunpack.c.l.b16 %v1008
        %v1185 = vunpack.c.h.b16 %v1008
        %v1186 = vunpack.c.l.b16 %v1009
        %v1187 = vunpack.c.h.b16 %v1009
        %v1188 = vunpack.c.l.b16 %v1010
        %v1189 = vunpack.c.h.b16 %v1010
        %v1190 = vunpack.c.l.b16 %v1011
        %v1191 = vunpack.c.h.b16 %v1011
        %v1192 = vunpack.c.l.b16 %v1012
        %v1193 = vunpack.c.h.b16 %v1012
        %v1194 = vunpack.c.l.b16 %v1013
        %v1195 = vunpack.c.h.b16 %v1013
        %v1196 = vunpack.c.l.b16 %v1014
        %v1197 = vunpack.c.h.b16 %v1014
        %v1198 = vunpack.c.l.b16 %v1015
        %v1199 = vunpack.c.h.b16 %v1015
        %v1200 = vunpack.c.l.b16 %v1016
        %v1201 = vunpack.c.h.b16 %v1016
        %v1202 = vunpack.c.l.b16 %v1017
        %v1203 = vunpack.c.h.b16 %v1017
        %v1204 = vpack.c.b16 %v1116, %v1108
        %v1205 = vpack.c.b16 %v1117, %v1109
        %v1206 = vpack.c.b16 %v1118, %v1110
        %v1207 = vpack.c.b16 %v1119, %v1111
        %v1208 = vpack.c.b16 %v1120, %v1112
        %v1209 = vpack.c.b16 %v1121, %v1113
        %v1210 = vpack.c.b16 %v1122, %v1114
        %v1211 = vpack.c.b16 %v1123, %v1115
        %v1212 = vpack.c.b16 %v1132, %v1124
        %v1213 = vpack.c.b16 %v1133, %v1125
        %v1214 = vpack.c.b16 %v1134, %v1126
        %v1215 = vpack.c.b16 %v1135, %v1127
        %v1216 = vpack.c.b16 %v1136, %v1128
        %v1217 = vpack.c.b16 %v1137, %v1129
        %v1218 = vpack.c.b16 %v1138, %v1130
        %v1219 = vpack.c.b16 %v1139, %v1131
        %v1220 = vpack.c.b16 %v1148, %v1140
        %v1221 = vpack.c.b16 %v1149, %v1141
        %v1222 = vpack.c.b16 %v1150, %v1142
        %v1223 = vpack.c.b16 %v1151, %v1143
        %v1224 = vpack.c.b16 %v1152, %v1144
        %v1225 = vpack.c.b16 %v1153, %v1145
        %v1226 = vpack.c.b16 %v1154, %v1146
        %v1227 = vpack.c.b16 %v1155, %v1147
        %v1228 = vpack.c.b16 %v1164, %v1156
        %v1229 = vpack.c.b16 %v1165, %v1157
        %v1230 = vpack.c.b16 %v1166, %v1158
        %v1231 = vpack.c.b16 %v1167, %v1159
        %v1232 = vpack.c.b16 %v1168, %v1160
        %v1233 = vpack.c.b16 %v1169, %v1161
        %v1234 = vpack.c.b16 %v1170, %v1162
        %v1235 = vpack.c.b16 %v1171, %v1163
        %v1236 = vpack.c.b16 %v1180, %v1172
        %v1237 = vpack.c.b16 %v1181, %v1173
        %v1238 = vpack.c.b16 %v1182, %v1174
        %v1239 = vpack.c.b16 %v1183, %v1175
        %v1240 = vpack.c.b16 %v1184, %v1176
        %v1241 = vpack.c.b16 %v1185, %v1177
        %v1242 = vpack.c.b16 %v1186, %v1178
        %v1243 = vpack.c.b16 %v1187, %v1179
        %v1244 = vpack.c.b16 %v1196, %v1188
        %v1245 = vpack.c.b16 %v1197, %v1189
        %v1246 = vpack.c.b16 %v1198, %v1190
        %v1247 = vpack.c.b16 %v1199, %v1191
        %v1248 = vpack.c.b16 %v1200, %v1192
        %v1249 = vpack.c.b16 %v1201, %v1193
        %v1250 = vpack.c.b16 %v1202, %v1194
        %v1251 = vpack.c.b16 %v1203, %v1195
        %vm1300 = vcmask 785408
        %v1302 = vsel %vm1300, %v969, 0
        %1304 = vmatprep.subr.bf16.mxu0 %v1205
        %1305 = vmatpush1.bf16.msra.mxu0 %v1204
        %1306 = vmatprep.subr.bf16.mxu0 %v1213
        %1307 = vmatpush1.bf16.msra.mxu0 %v1212
        %1308 = vmatprep.subr.bf16.mxu0 %v1221
        %1309 = vmatpush1.bf16.msra.mxu0 %v1220
        %1310 = vmatprep.subr.bf16.mxu0 %v1229
        %1311 = vmatpush1.bf16.msra.mxu0 %v1228
        %1312 = vmatprep.subr.bf16.mxu0 %v1237
        %1313 = vmatpush1.bf16.msra.mxu0 %v1236
        %1314 = vmatprep.subr.bf16.mxu0 %v1245
        %1315 = vmatpush1.bf16.msra.mxu0 %v1244
        %1316 = vmatprep.subr.bf16.mxu0 0
        %1317 = vmatpush1.bf16.msra.mxu0 0
        %1318 = vmatprep.subr.bf16.mxu0 0
        %1319 = vmatpush1.bf16.msra.mxu0 0
        %1320 = vmatprep.subr.bf16.mxu0 0
        %1321 = vmatpush1.bf16.msra.mxu0 0
        %1322 = vmatprep.subr.bf16.mxu0 0
        %1323 = vmatpush1.bf16.msra.mxu0 0
        %1324 = vmatprep.subr.bf16.mxu0 0
        %1325 = vmatpush1.bf16.msra.mxu0 0
        %1326 = vmatprep.subr.bf16.mxu0 0
        %1327 = vmatpush1.bf16.msra.mxu0 0
        %1328 = vmatprep.subr.bf16.mxu0 0
        %1329 = vmatpush1.bf16.msra.mxu0 0
        %1330 = vmatprep.subr.bf16.mxu0 0
        %1331 = vmatpush1.bf16.msra.mxu0 0
        %1332 = vmatprep.subr.bf16.mxu0 0
        %1333 = vmatpush1.bf16.msra.mxu0 0
        %1334 = vmatprep.subr.bf16.mxu0 0
        %1335 = vmatpush1.bf16.msra.mxu0 0
        %1336 = vmatprep.mubr.bf16.mxu0 0
        %1337 = vmatmul.mubr.bf16.gmra.mrb[0].mxu0 %v1302
        %v1338 = vpop.f32.mrb[0].mxu0
        %v1339 = vadd.f32 %v1023, %v1338
        %v1340 = vpop.f32.mrb[0].mxu0
        %v1341 = vadd.f32 %v1027, %v1340
        %v1342 = vpop.f32.mrb[0].mxu0
        %v1343 = vpop.f32.mrb[0].mxu0
        %1344 = vdwg.mxu0
        %1345 = vmatprep.subr.bf16.mxu0 %v1207
        %1346 = vmatpush1.bf16.msra.mxu0 %v1206
        %1347 = vmatprep.subr.bf16.mxu0 %v1215
        %1348 = vmatpush1.bf16.msra.mxu0 %v1214
        %1349 = vmatprep.subr.bf16.mxu0 %v1223
        %1350 = vmatpush1.bf16.msra.mxu0 %v1222
        %1351 = vmatprep.subr.bf16.mxu0 %v1231
        %1352 = vmatpush1.bf16.msra.mxu0 %v1230
        %1353 = vmatprep.subr.bf16.mxu0 %v1239
        %1354 = vmatpush1.bf16.msra.mxu0 %v1238
        %1355 = vmatprep.subr.bf16.mxu0 %v1247
        %1356 = vmatpush1.bf16.msra.mxu0 %v1246
        %1357 = vmatprep.subr.bf16.mxu0 0
        %1358 = vmatpush1.bf16.msra.mxu0 0
        %1359 = vmatprep.subr.bf16.mxu0 0
        %1360 = vmatpush1.bf16.msra.mxu0 0
        %1361 = vmatprep.subr.bf16.mxu0 0
        %1362 = vmatpush1.bf16.msra.mxu0 0
        %1363 = vmatprep.subr.bf16.mxu0 0
        %1364 = vmatpush1.bf16.msra.mxu0 0
        %1365 = vmatprep.subr.bf16.mxu0 0
        %1366 = vmatpush1.bf16.msra.mxu0 0
        %1367 = vmatprep.subr.bf16.mxu0 0
        %1368 = vmatpush1.bf16.msra.mxu0 0
        %1369 = vmatprep.subr.bf16.mxu0 0
        %1370 = vmatpush1.bf16.msra.mxu0 0
        %1371 = vmatprep.subr.bf16.mxu0 0
        %1372 = vmatpush1.bf16.msra.mxu0 0
        %1373 = vmatprep.subr.bf16.mxu0 0
        %1374 = vmatpush1.bf16.msra.mxu0 0
        %1375 = vmatprep.subr.bf16.mxu0 0
        %1376 = vmatpush1.bf16.msra.mxu0 0
        %1377 = vmatprep.mubr.bf16.mxu0 0
        %1378 = vmatmul.mubr.bf16.gmra.mrb[0].mxu0 %v1302
        %v1379 = vpop.f32.mrb[0].mxu0
        %v1380 = vadd.f32 %v1031, %v1379
        %v1381 = vpop.f32.mrb[0].mxu0
        %v1382 = vadd.f32 %v1035, %v1381
        %v1383 = vpop.f32.mrb[0].mxu0
        %v1384 = vpop.f32.mrb[0].mxu0
        %1385 = vdwg.mxu0
        %1386 = vmatprep.subr.bf16.mxu0 %v1209
        %1387 = vmatpush1.bf16.msra.mxu0 %v1208
        %1388 = vmatprep.subr.bf16.mxu0 %v1217
        %1389 = vmatpush1.bf16.msra.mxu0 %v1216
        %1390 = vmatprep.subr.bf16.mxu0 %v1225
        %1391 = vmatpush1.bf16.msra.mxu0 %v1224
        %1392 = vmatprep.subr.bf16.mxu0 %v1233
        %1393 = vmatpush1.bf16.msra.mxu0 %v1232
        %1394 = vmatprep.subr.bf16.mxu0 %v1241
        %1395 = vmatpush1.bf16.msra.mxu0 %v1240
        %1396 = vmatprep.subr.bf16.mxu0 %v1249
        %1397 = vmatpush1.bf16.msra.mxu0 %v1248
        %1398 = vmatprep.subr.bf16.mxu0 0
        %1399 = vmatpush1.bf16.msra.mxu0 0
        %1400 = vmatprep.subr.bf16.mxu0 0
        %1401 = vmatpush1.bf16.msra.mxu0 0
        %1402 = vmatprep.subr.bf16.mxu0 0
        %1403 = vmatpush1.bf16.msra.mxu0 0
        %1404 = vmatprep.subr.bf16.mxu0 0
        %1405 = vmatpush1.bf16.msra.mxu0 0
        %1406 = vmatprep.subr.bf16.mxu0 0
        %1407 = vmatpush1.bf16.msra.mxu0 0
        %1408 = vmatprep.subr.bf16.mxu0 0
        %1409 = vmatpush1.bf16.msra.mxu0 0
        %1410 = vmatprep.subr.bf16.mxu0 0
        %1411 = vmatpush1.bf16.msra.mxu0 0
        %1412 = vmatprep.subr.bf16.mxu0 0
        %1413 = vmatpush1.bf16.msra.mxu0 0
        %1414 = vmatprep.subr.bf16.mxu0 0
        %1415 = vmatpush1.bf16.msra.mxu0 0
        %1416 = vmatprep.subr.bf16.mxu0 0
        %1417 = vmatpush1.bf16.msra.mxu0 0
        %1418 = vmatprep.mubr.bf16.mxu0 0
        %1419 = vmatmul.mubr.bf16.gmra.mrb[0].mxu0 %v1302
        %v1420 = vpop.f32.mrb[0].mxu0
        %v1421 = vadd.f32 %v1039, %v1420
        %v1422 = vpop.f32.mrb[0].mxu0
        %v1423 = vadd.f32 %v1043, %v1422
        %v1424 = vpop.f32.mrb[0].mxu0
        %v1425 = vpop.f32.mrb[0].mxu0
        %1426 = vdwg.mxu0
        %1427 = vmatprep.subr.bf16.mxu0 %v1211
        %1428 = vmatpush1.bf16.msra.mxu0 %v1210
        %1429 = vmatprep.subr.bf16.mxu0 %v1219
        %1430 = vmatpush1.bf16.msra.mxu0 %v1218
        %1431 = vmatprep.subr.bf16.mxu0 %v1227
        %1432 = vmatpush1.bf16.msra.mxu0 %v1226
        %1433 = vmatprep.subr.bf16.mxu0 %v1235
        %1434 = vmatpush1.bf16.msra.mxu0 %v1234
        %1435 = vmatprep.subr.bf16.mxu0 %v1243
        %1436 = vmatpush1.bf16.msra.mxu0 %v1242
        %1437 = vmatprep.subr.bf16.mxu0 %v1251
        %1438 = vmatpush1.bf16.msra.mxu0 %v1250
        %1439 = vmatprep.subr.bf16.mxu0 0
        %1440 = vmatpush1.bf16.msra.mxu0 0
        %1441 = vmatprep.subr.bf16.mxu0 0
        %1442 = vmatpush1.bf16.msra.mxu0 0
        %1443 = vmatprep.subr.bf16.mxu0 0
        %1444 = vmatpush1.bf16.msra.mxu0 0
        %1445 = vmatprep.subr.bf16.mxu0 0
        %1446 = vmatpush1.bf16.msra.mxu0 0
        %1447 = vmatprep.subr.bf16.mxu0 0
        %1448 = vmatpush1.bf16.msra.mxu0 0
        %1449 = vmatprep.subr.bf16.mxu0 0
        %1450 = vmatpush1.bf16.msra.mxu0 0
        %1451 = vmatprep.subr.bf16.mxu0 0
        %1452 = vmatpush1.bf16.msra.mxu0 0
        %1453 = vmatprep.subr.bf16.mxu0 0
        %1454 = vmatpush1.bf16.msra.mxu0 0
        %1455 = vmatprep.subr.bf16.mxu0 0
        %1456 = vmatpush1.bf16.msra.mxu0 0
        %1457 = vmatprep.subr.bf16.mxu0 0
        %1458 = vmatpush1.bf16.msra.mxu0 0
        %1459 = vmatprep.mubr.bf16.mxu0 0
        %1460 = vmatmul.mubr.bf16.gmra.mrb[0].mxu0 %v1302
        %v1461 = vpop.f32.mrb[0].mxu0
        %v1462 = vadd.f32 %v1047, %v1461
        %v1463 = vpop.f32.mrb[0].mxu0
        %v1464 = vadd.f32 %v1051, %v1463
        %v1465 = vpop.f32.mrb[0].mxu0
        %v1466 = vpop.f32.mrb[0].mxu0
        %1467 = vdwg.mxu0
        %1468 = vst [vmem:[%s495] sm:$0xff] %v1339
        %1469 = vst [vmem:[%s495 + $0x8] sm:$0xff] %v1341
        %1470 = vst [vmem:[%s495 + $0x10] sm:$0xff] %v1380
        %1471 = vst [vmem:[%s495 + $0x18] sm:$0xff] %v1382
        %1472 = vst [vmem:[%s495 + $0x20] sm:$0xff] %v1421
        %1473 = vst [vmem:[%s495 + $0x28] sm:$0xff] %v1423
        %1474 = vst [vmem:[%s495 + $0x30] sm:$0xff] %v1462
        %1475 = vst [vmem:[%s495 + $0x38] sm:$0xff] %v1464
        %s1476 = sand.u32 %s234, 1
        %s1477 = scalar_lea.sflag [#allocation5], %s1476
        %s1478 = sand.u32 %s234, 1
        %s1479 = smul.addr %s1478, 64
        %s1480 = scalar_lea.vmem [#allocation7], %s1479
        // Predicated region
        $region88: #{_lambda_.1} parent=74 // pred_check
          %p1481 = pneg %p244
        $region89: #{_lambda_.1} parent=74 // pred_check_branch
          %1483 = sbr.rel (%p1481) target = $region91
        $region90: #{_lambda_.1} parent=74 // pred_region
          %s1484 = smul.u32 8, %s27
          %s1486 = ssub.s32 1024, 1024
          %1487 = vsyncadd %s1477, %s1486
          %s1488 = smul.addr %s1484, 128
          %s1489 = scalar_lea.hbm %s9, %s1488
          %s1491 = sshll.u32 %s1480, 4
          %s1492 = int_to_ptr.vmem [resolvable:$true] %s1491
          %1494 = dma.vmem_to_hbm [thread:$0]  %s1492, 1024, %s1489, %s1477
        $region91: #{_lambda_.1} parent=74 // pred_fallthru
          _
        // Predicated region
        $region92: #{_lambda_.1} parent=74 // pred_check
          %p1495 = pneg %p265
        $region93: #{_lambda_.1} parent=74 // pred_check_branch
          %1497 = sbr.rel (%p1495) target = $region95
        $region94: #{_lambda_.1} parent=74 // pred_region
          %s1499 = ssub.s32 128, 128
          %1500 = vsyncadd [#allocation9], %s1499
          %s1502 = sshll.u32 [#allocation8], 4
          %s1503 = int_to_ptr.vmem [resolvable:$true] %s1502
          %1505 = dma.vmem_to_hbm [thread:$0]  %s1503, 128, %s10, [#allocation9]
        $region95: #{_lambda_.1} parent=74 // pred_fallthru
          _
        // Predicated region
        $region96: #{_lambda_.1} parent=74 // pred_check
          %p1506 = pneg %p265
        $region97: #{_lambda_.1} parent=74 // pred_check_branch
          %1508 = sbr.rel (%p1506) target = $region99
        $region98: #{_lambda_.1} parent=74 // pred_region
          %1509 = dma.done [#allocation9], 128
        $region99: #{_lambda_.1} parent=74 // pred_fallthru
          _
      $region75: #{_lambda_.1} parent=5 // pred_fallthru
        _
      %p1510 = scmp.le.s32.totalorder 2, %s22
      // Predicated region
      $region100: #{_lambda_.1} parent=5 // pred_check
        %p1511 = pneg %p1510
      $region101: #{_lambda_.1} parent=5 // pred_check_branch
        %1513 = sbr.rel (%p1511) target = $region103
      $region102: #{_lambda_.1} parent=5 // pred_region
        %s1514 = ssub.s32 %s22, 2
        // Predicated region
        $region104: #{_lambda_.1} parent=102 // pred_check
          %p1515 = pneg %p250
        $region105: #{_lambda_.1} parent=102 // pred_check_branch
          %1517 = sbr.rel (%p1515) target = $region107
        $region106: #{_lambda_.1} parent=102 // pred_region
          %s1518 = sand.u32 %s235, 1
          %s1519 = scalar_lea.sflag [#allocation5], %s1518
          %s1520 = sand.u32 %s235, 1
          %s1521 = smul.addr %s1520, 64
          %s1522 = scalar_lea.vmem [#allocation7], %s1521
          %1523 = dma.done %s1519, 1024
        $region107: #{_lambda_.1} parent=102 // pred_fallthru
          _
      $region103: #{_lambda_.1} parent=5 // pred_fallthru
        _
    $region6: #{_lambda_.1} parent=1 // loop_footer
      %s26 = sadd.s32 1, %s22
    $region7: #{_lambda_.1} parent=1 // loop_footer_branch
      %21 = sbr.rel target = $region3
    $region8: #{_lambda_.1} parent=1 // loop_exit
      _
    %1524 = vsyncpa [#allocation4], 1
    %s1525 = scalar_lea.sflag [#allocation4], 1
    %1526 = vsyncpa %s1525, 1
    %1527 = vsyncpa [#allocation5], 1
    %s1528 = scalar_lea.sflag [#allocation5], 1
    %1529 = vsyncpa %s1528, 1
    %1530 = vsyncpa [#allocation9], 1

</llo_original>
